<compile_context>
chip_gen: v7x
topology: tpu7x:2x2x1
jax: 0.10.0
libtpu: 0.0.40
codegen_flags: <defaults>
</compile_context>

<pallas_src>
import functools
import math

import jax
import jax.numpy as jnp
from jax.experimental import pallas as pl
from jax.experimental.pallas import tpu as pltpu


# ---------------------------------------------------------------------------
# Pallas kernel: the whole OctaveConv forward = ONE matmul per grid step.
# ---------------------------------------------------------------------------
def _octave_conv_kernel(xh_ref, xl_ref, w_ref, o_ref,
                        pad_h_ref, pad_l_ref, cols_ref):
    """xh_ref : (bt, h, w, 4*ch) bf16   space-to-depth packed high-freq input
    xl_ref : (bt, h, w, cl)   bf16   low-freq input (NHWC)
    w_ref  : (36*ch + 9*cl, n_pad) bf16  fused weight matrix
             cols [0, 4*co_h)           : w_hh scattered over 4 output phases
                                          + w_lh replicated (upsample folded in)
             cols [4*co_h, 4*co_h+co_l) : 0.25*w_hl (pool folded in) + w_ll
             cols [4*co_h+co_l, n_pad)  : zero (lane alignment)
    o_ref  : (bt, h*w, n_pad) f32    fused lane-dense output
    pad_*  : f32 VMEM scratch, zero-padded operands (border zeroed each step)
    cols_ref : (bt*h*w, 36*ch + 9*cl) bf16 VMEM scratch, stacked im2col operand
    """
    bt, h, w, c4h = xh_ref.shape
    cl = xl_ref.shape[3]
    m = bt * h * w

    # ---- zero only the 1-pixel border (tiny vs. full-buffer zeroing; also
    #      correct when the "parallel" grid axis is sharded across cores) ----
    pad_h_ref[:, 0:1, :, :] = jnp.zeros((bt, 1, w + 2, c4h), jnp.float32)
    pad_h_ref[:, h + 1:h + 2, :, :] = jnp.zeros((bt, 1, w + 2, c4h), jnp.float32)
    pad_h_ref[:, :, 0:1, :] = jnp.zeros((bt, h + 2, 1, c4h), jnp.float32)
    pad_h_ref[:, :, w + 1:w + 2, :] = jnp.zeros((bt, h + 2, 1, c4h), jnp.float32)

    pad_l_ref[:, 0:1, :, :] = jnp.zeros((bt, 1, w + 2, cl), jnp.float32)
    pad_l_ref[:, h + 1:h + 2, :, :] = jnp.zeros((bt, 1, w + 2, cl), jnp.float32)
    pad_l_ref[:, :, 0:1, :] = jnp.zeros((bt, h + 2, 1, cl), jnp.float32)
    pad_l_ref[:, :, w + 1:w + 2, :] = jnp.zeros((bt, h + 2, 1, cl), jnp.float32)

    # ---- interior write (exactly covers [1:h+1, 1:w+1]) ----
    pad_h_ref[:, 1:h + 1, 1:w + 1, :] = xh_ref[...].astype(jnp.float32)
    pad_l_ref[:, 1:h + 1, 1:w + 1, :] = xl_ref[...].astype(jnp.float32)

    # ---- direct-store im2col: one load + one bf16 store per 3x3 tap ----
    for t in range(9):
        i, j = divmod(t, 3)
        cols_ref[:, t * c4h:(t + 1) * c4h] = (
            pad_h_ref[:, i:i + h, j:j + w, :]
            .reshape(m, c4h).astype(jnp.bfloat16))
    base = 9 * c4h
    for t in range(9):
        i, j = divmod(t, 3)
        cols_ref[:, base + t * cl:base + (t + 1) * cl] = (
            pad_l_ref[:, i:i + h, j:j + w, :]
            .reshape(m, cl).astype(jnp.bfloat16))

    # ---- four convs + pool + upsample + both adds = ONE MXU matmul ----
    y = jnp.dot(cols_ref[...], w_ref[...], preferred_element_type=jnp.float32)
    o_ref[...] = y.reshape(o_ref.shape)


# ---------------------------------------------------------------------------
# Weight packing (tiny, trace-time): one fused (Ktot, Npad) RHS matrix.
# ---------------------------------------------------------------------------
def _pack_weights(w_hh, w_hl, w_ll, w_lh, n_pad):
    kh, kw, ch, co_h = w_hh.shape
    cl, co_l = w_ll.shape[2], w_ll.shape[3]
    k_hi = kh * kw * 4 * ch
    mat = jnp.zeros((k_hi + kh * kw * cl, n_pad), jnp.float32)

    # conv_hh: output phase (up, vp), tap (i, j) reads input phase (us, vt) at
    # space-to-depth window offset (di, dj) of the padded packed buffer.
    for up in range(2):
        for vp in range(2):
            c0 = (up * 2 + vp) * co_h
            for i in range(kh):
                for j in range(kw):
                    s, t = up + i - 1, vp + j - 1
                    di, us = s // 2 + 1, s % 2
                    dj, vt = t // 2 + 1, t % 2
                    r0 = ((di * 3 + dj) * 4 + (us * 2 + vt)) * ch
                    mat = mat.at[r0:r0 + ch, c0:c0 + co_h].set(w_hh[i, j])

    # conv_hl on avgpool2x2(x_h): every input phase contributes 0.25*w_hl
    # (0.25 is a power of two, so folding before the bf16 cast is exact).
    for i in range(kh):
        for j in range(kw):
            for p in range(4):
                r0 = ((i * 3 + j) * 4 + p) * ch
                mat = mat.at[r0:r0 + ch,
                             4 * co_h:4 * co_h + co_l].set(0.25 * w_hl[i, j])

    # Low-frequency rows: conv_ll into the out_l columns; conv_lh replicated
    # into all four out_h phase blocks (this IS the nearest-2x upsample).
    for i in range(kh):
        for j in range(kw):
            r0 = k_hi + (i * 3 + j) * cl
            mat = mat.at[r0:r0 + cl, 4 * co_h:4 * co_h + co_l].set(w_ll[i, j])
            for p in range(4):
                mat = mat.at[r0:r0 + cl, p * co_h:(p + 1) * co_h].set(w_lh[i, j])

    return mat.astype(jnp.bfloat16)


def _nbytes(shape, dtype):
    return math.prod(shape) * jnp.dtype(dtype).itemsize


# ---------------------------------------------------------------------------
# Wrapper: layout plumbing (NCHW <-> space-to-depth NHWC) + pallas_call.
# ---------------------------------------------------------------------------
@functools.partial(jax.jit, static_argnames=("b_tile",))
def octave_conv_forward(x_h_nchw, x_l_nchw, params, *, b_tile=1):
    n, ch, hh, ww = x_h_nchw.shape
    _, cl, h, w = x_l_nchw.shape
    assert hh == 2 * h and ww == 2 * w
    assert n % b_tile == 0
    co_h = params["w_hh"].shape[3]
    co_l = params["w_ll"].shape[3]

    ktot = 9 * 4 * ch + 9 * cl
    n_out = 4 * co_h + co_l
    n_pad = ((n_out + 127) // 128) * 128      # lane-dense, unmasked output stores
    m = b_tile * h * w

    # ---- wrapper-side layout plumbing (single XLA transpose, bf16 cast fused) ----
    xh_s2d = (x_h_nchw.reshape(n, ch, h, 2, w, 2)
              .transpose(0, 2, 4, 3, 5, 1)
              .reshape(n, h, w, 4 * ch)
              .astype(jnp.bfloat16))
    xl_nhwc = jnp.transpose(x_l_nchw, (0, 2, 3, 1)).astype(jnp.bfloat16)

    w_mat = _pack_weights(params["w_hh"], params["w_hl"],
                          params["w_ll"], params["w_lh"], n_pad)

    # ---- explicit VMEM budget (v5e default scoped limit is only 16 MiB) ----
    scratch_bytes = (_nbytes((b_tile, h + 2, w + 2, 4 * ch), jnp.float32)
                     + _nbytes((b_tile, h + 2, w + 2, cl), jnp.float32)
                     + _nbytes((m, ktot), jnp.bfloat16))
    io_bytes = 2 * (_nbytes((b_tile, h, w, 4 * ch), jnp.bfloat16)
                    + _nbytes((b_tile, h, w, cl), jnp.bfloat16)
                    + _nbytes((ktot, n_pad), jnp.bfloat16)
                    + _nbytes((b_tile, h * w, n_pad), jnp.float32))
    vmem_limit = int(min(64 << 20, max(2 * (scratch_bytes + io_bytes), 16 << 20)))

    out_fused = pl.pallas_call(
        _octave_conv_kernel,
        grid=(n // b_tile,),
        in_specs=[
            pl.BlockSpec((b_tile, h, w, 4 * ch), lambda b: (b, 0, 0, 0)),
            pl.BlockSpec((b_tile, h, w, cl), lambda b: (b, 0, 0, 0)),
            pl.BlockSpec((ktot, n_pad), lambda b: (0, 0)),
        ],
        out_specs=pl.BlockSpec((b_tile, h * w, n_pad), lambda b: (b, 0, 0)),
        out_shape=jax.ShapeDtypeStruct((n, h * w, n_pad), jnp.float32),
        scratch_shapes=[
            pltpu.VMEM((b_tile, h + 2, w + 2, 4 * ch), jnp.float32),
            pltpu.VMEM((b_tile, h + 2, w + 2, cl), jnp.float32),
            pltpu.VMEM((m, ktot), jnp.bfloat16),
        ],
        compiler_params=pltpu.CompilerParams(
            dimension_semantics=("parallel",),
            vmem_limit_bytes=vmem_limit),
    )(xh_s2d, xl_nhwc, w_mat)

    # ---- unpack the fused lane-dense output back to NCHW ----
    out_h = (out_fused[:, :, :4 * co_h]
             .reshape(n, h, w, 2, 2, co_h)
             .transpose(0, 5, 1, 3, 2, 4)
             .reshape(n, co_h, hh, ww))
    out_l = (out_fused[:, :, 4 * co_h:4 * co_h + co_l]
             .reshape(n, h, w, co_l)
             .transpose(0, 3, 1, 2))
    return out_h, out_l


# ---------------------------------------------------------------------------
# Parameter init (PyTorch Conv2d default init, channel split per alpha).
# ---------------------------------------------------------------------------
def _conv_weight(key, kh, kw, cin, cout):
    fan_in = cin * kh * kw
    bound = 1.0 / (fan_in ** 0.5)
    return jax.random.uniform(key, (kh, kw, cin, cout), jnp.float32, -bound, bound)


def init_params(key, in_channels, out_channels, kernel_size=3,
                alpha_in=0.5, alpha_out=0.5):
    in_low = int(in_channels * alpha_in)
    in_high = in_channels - in_low
    out_low = int(out_channels * alpha_out)
    out_high = out_channels - out_low
    k1, k2, k3, k4 = jax.random.split(key, 4)
    return {
        "w_hh": _conv_weight(k1, kernel_size, kernel_size, in_high, out_high),
        "w_hl": _conv_weight(k2, kernel_size, kernel_size, in_high, out_low),
        "w_ll": _conv_weight(k3, kernel_size, kernel_size, in_low, out_low),
        "w_lh": _conv_weight(k4, kernel_size, kernel_size, in_low, out_high),
    }


# ---------------------------------------------------------------------------
# Pure-JAX reference (same bf16 operand rounding, f32 accumulation).
# ---------------------------------------------------------------------------
def _avgpool2x2_nhwc(x):
    return 0.25 * (x[:, 0::2, 0::2, :] + x[:, 0::2, 1::2, :]
                   + x[:, 1::2, 0::2, :] + x[:, 1::2, 1::2, :])


def _upsample2x_nhwc(x):
    return jnp.repeat(jnp.repeat(x, 2, axis=1), 2, axis=2)


def reference_forward(x_h_nchw, x_l_nchw, params):
    def r(t):  # mirror the kernel's bf16 operand rounding, math in f32
        return t.astype(jnp.bfloat16).astype(jnp.float32)

    def conv(x, wgt):
        return jax.lax.conv_general_dilated(
            x, r(wgt), (1, 1), [(1, 1), (1, 1)],
            dimension_numbers=("NHWC", "HWIO", "NHWC"),
            precision=jax.lax.Precision.HIGHEST)

    x_h = r(jnp.transpose(x_h_nchw, (0, 2, 3, 1)))
    x_l = r(jnp.transpose(x_l_nchw, (0, 2, 3, 1)))
    y_hh = conv(x_h, params["w_hh"])
    y_hl = conv(_avgpool2x2_nhwc(x_h), params["w_hl"])
    y_ll = conv(x_l, params["w_ll"])
    y_lh = conv(x_l, params["w_lh"])
    out_h = y_hh + _upsample2x_nhwc(y_lh)
    out_l = y_hl + y_ll
    return (jnp.transpose(out_h, (0, 3, 1, 2)),
            jnp.transpose(out_l, (0, 3, 1, 2)))


# ---------------------------------------------------------------------------
if __name__ == "__main__":
    in_channels, out_channels = 8, 8          # alpha=0.5 -> 4 high / 4 low each
    batch, spatial = 2, 16

    key = jax.random.PRNGKey(0)
    kx1, kx2, kp = jax.random.split(key, 3)
    # high-frequency branch at full resolution, low-frequency at half resolution
    x_h = jax.random.normal(
        kx1, (batch, in_channels // 2, spatial, spatial), jnp.float32)
    x_l = jax.random.normal(
        kx2, (batch, in_channels // 2, spatial // 2, spatial // 2), jnp.float32)

    params = init_params(kp, in_channels, out_channels)

    out_h, out_l = octave_conv_forward(x_h, x_l, params)
    jax.block_until_ready((out_h, out_l))

    ref_h, ref_l = reference_forward(x_h, x_l, params)
    assert out_h.shape == (batch, out_channels // 2, spatial, spatial)
    assert out_l.shape == (batch, out_channels // 2, spatial // 2, spatial // 2)
    assert jnp.allclose(out_h, ref_h, rtol=1e-3, atol=1e-3), \
        float(jnp.max(jnp.abs(out_h - ref_h)))
    assert jnp.allclose(out_l, ref_l, rtol=1e-3, atol=1e-3), \
        float(jnp.max(jnp.abs(out_l - ref_l)))

    print("KERNEL_OK")
</pallas_src>

<mosaic_0001>
module attributes {stable_mosaic.version = 11 : i64} {
  func.func @_octave_conv_kernel(%arg0: i32, %arg1: memref<1x8x8x16xbf16, #tpu.memory_space<vmem>>, %arg2: memref<1x8x8x4xbf16, #tpu.memory_space<vmem>>, %arg3: memref<180x128xbf16, #tpu.memory_space<vmem>>, %arg4: memref<1x64x128xf32, #tpu.memory_space<vmem>>, %arg5: memref<1x10x10x16xf32, #tpu.memory_space<vmem>>, %arg6: memref<1x10x10x4xf32, #tpu.memory_space<vmem>>, %arg7: memref<64x180xbf16, #tpu.memory_space<vmem>>) attributes {dimension_semantics = [#tpu.dimension_semantics<parallel>], iteration_bounds = array<i64: 2>, scalar_prefetch = 0 : i64, scratch_operands = 3 : i64, tpu.core_type = #tpu.core_type<tc>, window_params = [{transform_indices = @transform_0, window_bounds = array<i64: 1, 8, 8, 16>}, {transform_indices = @transform_1, window_bounds = array<i64: 1, 8, 8, 4>}, {pipeline_mode = #tpu.pipeline_mode<synchronous>, transform_indices = @transform_2, window_bounds = array<i64: 180, 128>}, {transform_indices = @transform_3, window_bounds = array<i64: 1, 64, 128>}]} {
    %cst = arith.constant 0.000000e+00 : f32
    %0 = vector.broadcast %cst : f32 to vector<1x1x10x16xf32>
    %c0 = arith.constant 0 : index
    %c0_0 = arith.constant 0 : index
    %c0_1 = arith.constant 0 : index
    %c0_2 = arith.constant 0 : index
    %1 = vector.load %arg5[%c0, %c0_0, %c0_1, %c0_2] : memref<1x10x10x16xf32, #tpu.memory_space<vmem>>, vector<1x1x10x16xf32>
    tpu.vector_store %arg5[%c0, %c0_0, %c0_1, %c0_2], %0 {strides = array<i32>} : memref<1x10x10x16xf32, #tpu.memory_space<vmem>>, vector<1x1x10x16xf32>,
    %cst_3 = arith.constant 0.000000e+00 : f32
    %2 = vector.broadcast %cst_3 : f32 to vector<1x1x10x16xf32>
    %c0_4 = arith.constant 0 : index
    %c9 = arith.constant 9 : index
    %c0_5 = arith.constant 0 : index
    %c0_6 = arith.constant 0 : index
    %3 = vector.load %arg5[%c0_4, %c9, %c0_5, %c0_6] : memref<1x10x10x16xf32, #tpu.memory_space<vmem>>, vector<1x1x10x16xf32>
    tpu.vector_store %arg5[%c0_4, %c9, %c0_5, %c0_6], %2 {strides = array<i32>} : memref<1x10x10x16xf32, #tpu.memory_space<vmem>>, vector<1x1x10x16xf32>,
    %cst_7 = arith.constant 0.000000e+00 : f32
    %4 = vector.broadcast %cst_7 : f32 to vector<1x10x1x16xf32>
    %c0_8 = arith.constant 0 : index
    %c0_9 = arith.constant 0 : index
    %c0_10 = arith.constant 0 : index
    %c0_11 = arith.constant 0 : index
    %5 = vector.load %arg5[%c0_8, %c0_9, %c0_10, %c0_11] : memref<1x10x10x16xf32, #tpu.memory_space<vmem>>, vector<1x10x1x16xf32>
    tpu.vector_store %arg5[%c0_8, %c0_9, %c0_10, %c0_11], %4 {strides = array<i32>} : memref<1x10x10x16xf32, #tpu.memory_space<vmem>>, vector<1x10x1x16xf32>,
    %cst_12 = arith.constant 0.000000e+00 : f32
    %6 = vector.broadcast %cst_12 : f32 to vector<1x10x1x16xf32>
    %c0_13 = arith.constant 0 : index
    %c0_14 = arith.constant 0 : index
    %c9_15 = arith.constant 9 : index
    %c0_16 = arith.constant 0 : index
    %7 = vector.load %arg5[%c0_13, %c0_14, %c9_15, %c0_16] : memref<1x10x10x16xf32, #tpu.memory_space<vmem>>, vector<1x10x1x16xf32>
    tpu.vector_store %arg5[%c0_13, %c0_14, %c9_15, %c0_16], %6 {strides = array<i32>} : memref<1x10x10x16xf32, #tpu.memory_space<vmem>>, vector<1x10x1x16xf32>,
    %cst_17 = arith.constant 0.000000e+00 : f32
    %8 = vector.broadcast %cst_17 : f32 to vector<1x1x10x4xf32>
    %c0_18 = arith.constant 0 : index
    %c0_19 = arith.constant 0 : index
    %c0_20 = arith.constant 0 : index
    %c0_21 = arith.constant 0 : index
    %9 = vector.load %arg6[%c0_18, %c0_19, %c0_20, %c0_21] : memref<1x10x10x4xf32, #tpu.memory_space<vmem>>, vector<1x1x10x4xf32>
    tpu.vector_store %arg6[%c0_18, %c0_19, %c0_20, %c0_21], %8 {strides = array<i32>} : memref<1x10x10x4xf32, #tpu.memory_space<vmem>>, vector<1x1x10x4xf32>,
    %cst_22 = arith.constant 0.000000e+00 : f32
    %10 = vector.broadcast %cst_22 : f32 to vector<1x1x10x4xf32>
    %c0_23 = arith.constant 0 : index
    %c9_24 = arith.constant 9 : index
    %c0_25 = arith.constant 0 : index
    %c0_26 = arith.constant 0 : index
    %11 = vector.load %arg6[%c0_23, %c9_24, %c0_25, %c0_26] : memref<1x10x10x4xf32, #tpu.memory_space<vmem>>, vector<1x1x10x4xf32>
    tpu.vector_store %arg6[%c0_23, %c9_24, %c0_25, %c0_26], %10 {strides = array<i32>} : memref<1x10x10x4xf32, #tpu.memory_space<vmem>>, vector<1x1x10x4xf32>,
    %cst_27 = arith.constant 0.000000e+00 : f32
    %12 = vector.broadcast %cst_27 : f32 to vector<1x10x1x4xf32>
    %c0_28 = arith.constant 0 : index
    %c0_29 = arith.constant 0 : index
    %c0_30 = arith.constant 0 : index
    %c0_31 = arith.constant 0 : index
    %13 = vector.load %arg6[%c0_28, %c0_29, %c0_30, %c0_31] : memref<1x10x10x4xf32, #tpu.memory_space<vmem>>, vector<1x10x1x4xf32>
    tpu.vector_store %arg6[%c0_28, %c0_29, %c0_30, %c0_31], %12 {strides = array<i32>} : memref<1x10x10x4xf32, #tpu.memory_space<vmem>>, vector<1x10x1x4xf32>,
    %cst_32 = arith.constant 0.000000e+00 : f32
    %14 = vector.broadcast %cst_32 : f32 to vector<1x10x1x4xf32>
    %c0_33 = arith.constant 0 : index
    %c0_34 = arith.constant 0 : index
    %c9_35 = arith.constant 9 : index
    %c0_36 = arith.constant 0 : index
    %15 = vector.load %arg6[%c0_33, %c0_34, %c9_35, %c0_36] : memref<1x10x10x4xf32, #tpu.memory_space<vmem>>, vector<1x10x1x4xf32>
    tpu.vector_store %arg6[%c0_33, %c0_34, %c9_35, %c0_36], %14 {strides = array<i32>} : memref<1x10x10x4xf32, #tpu.memory_space<vmem>>, vector<1x10x1x4xf32>,
    %c0_37 = arith.constant 0 : index
    %c0_38 = arith.constant 0 : index
    %c0_39 = arith.constant 0 : index
    %c0_40 = arith.constant 0 : index
    %16 = vector.load %arg1[%c0_37, %c0_38, %c0_39, %c0_40] : memref<1x8x8x16xbf16, #tpu.memory_space<vmem>>, vector<1x8x8x16xbf16>
    %17 = arith.extf %16 : vector<1x8x8x16xbf16> to vector<1x8x8x16xf32>
    %c0_41 = arith.constant 0 : index
    %c1 = arith.constant 1 : index
    %c1_42 = arith.constant 1 : index
    %c0_43 = arith.constant 0 : index
    %18 = vector.load %arg5[%c0_41, %c1, %c1_42, %c0_43] : memref<1x10x10x16xf32, #tpu.memory_space<vmem>>, vector<1x8x8x16xf32>
    tpu.vector_store %arg5[%c0_41, %c1, %c1_42, %c0_43], %17 {strides = array<i32>} : memref<1x10x10x16xf32, #tpu.memory_space<vmem>>, vector<1x8x8x16xf32>,
    %c0_44 = arith.constant 0 : index
    %c0_45 = arith.constant 0 : index
    %c0_46 = arith.constant 0 : index
    %c0_47 = arith.constant 0 : index
    %19 = vector.load %arg2[%c0_44, %c0_45, %c0_46, %c0_47] : memref<1x8x8x4xbf16, #tpu.memory_space<vmem>>, vector<1x8x8x4xbf16>
    %20 = arith.extf %19 : vector<1x8x8x4xbf16> to vector<1x8x8x4xf32>
    %c0_48 = arith.constant 0 : index
    %c1_49 = arith.constant 1 : index
    %c1_50 = arith.constant 1 : index
    %c0_51 = arith.constant 0 : index
    %21 = vector.load %arg6[%c0_48, %c1_49, %c1_50, %c0_51] : memref<1x10x10x4xf32, #tpu.memory_space<vmem>>, vector<1x8x8x4xf32>
    tpu.vector_store %arg6[%c0_48, %c1_49, %c1_50, %c0_51], %20 {strides = array<i32>} : memref<1x10x10x4xf32, #tpu.memory_space<vmem>>, vector<1x8x8x4xf32>,
    %c0_52 = arith.constant 0 : index
    %c0_53 = arith.constant 0 : index
    %c0_54 = arith.constant 0 : index
    %c0_55 = arith.constant 0 : index
    %22 = vector.load %arg5[%c0_52, %c0_53, %c0_54, %c0_55] : memref<1x10x10x16xf32, #tpu.memory_space<vmem>>, vector<1x8x8x16xf32>
    %23 = vector.shape_cast %22 : vector<1x8x8x16xf32> to vector<64x16xf32>
    %24 = arith.truncf %23 : vector<64x16xf32> to vector<64x16xbf16>
    %c0_56 = arith.constant 0 : index
    %c0_57 = arith.constant 0 : index
    %25 = vector.load %arg7[%c0_56, %c0_57] : memref<64x180xbf16, #tpu.memory_space<vmem>>, vector<64x16xbf16>
    tpu.vector_store %arg7[%c0_56, %c0_57], %24 {strides = array<i32>} : memref<64x180xbf16, #tpu.memory_space<vmem>>, vector<64x16xbf16>,
    %c0_58 = arith.constant 0 : index
    %c0_59 = arith.constant 0 : index
    %c1_60 = arith.constant 1 : index
    %c0_61 = arith.constant 0 : index
    %26 = vector.load %arg5[%c0_58, %c0_59, %c1_60, %c0_61] : memref<1x10x10x16xf32, #tpu.memory_space<vmem>>, vector<1x8x8x16xf32>
    %27 = vector.shape_cast %26 : vector<1x8x8x16xf32> to vector<64x16xf32>
    %28 = arith.truncf %27 : vector<64x16xf32> to vector<64x16xbf16>
    %c0_62 = arith.constant 0 : index
    %c16 = arith.constant 16 : index
    %29 = vector.load %arg7[%c0_62, %c16] : memref<64x180xbf16, #tpu.memory_space<vmem>>, vector<64x16xbf16>
    tpu.vector_store %arg7[%c0_62, %c16], %28 {strides = array<i32>} : memref<64x180xbf16, #tpu.memory_space<vmem>>, vector<64x16xbf16>,
    %c0_63 = arith.constant 0 : index
    %c0_64 = arith.constant 0 : index
    %c2 = arith.constant 2 : index
    %c0_65 = arith.constant 0 : index
    %30 = vector.load %arg5[%c0_63, %c0_64, %c2, %c0_65] : memref<1x10x10x16xf32, #tpu.memory_space<vmem>>, vector<1x8x8x16xf32>
    %31 = vector.shape_cast %30 : vector<1x8x8x16xf32> to vector<64x16xf32>
    %32 = arith.truncf %31 : vector<64x16xf32> to vector<64x16xbf16>
    %c0_66 = arith.constant 0 : index
    %c32 = arith.constant 32 : index
    %33 = vector.load %arg7[%c0_66, %c32] : memref<64x180xbf16, #tpu.memory_space<vmem>>, vector<64x16xbf16>
    tpu.vector_store %arg7[%c0_66, %c32], %32 {strides = array<i32>} : memref<64x180xbf16, #tpu.memory_space<vmem>>, vector<64x16xbf16>,
    %c0_67 = arith.constant 0 : index
    %c1_68 = arith.constant 1 : index
    %c0_69 = arith.constant 0 : index
    %c0_70 = arith.constant 0 : index
    %34 = vector.load %arg5[%c0_67, %c1_68, %c0_69, %c0_70] : memref<1x10x10x16xf32, #tpu.memory_space<vmem>>, vector<1x8x8x16xf32>
    %35 = vector.shape_cast %34 : vector<1x8x8x16xf32> to vector<64x16xf32>
    %36 = arith.truncf %35 : vector<64x16xf32> to vector<64x16xbf16>
    %c0_71 = arith.constant 0 : index
    %c48 = arith.constant 48 : index
    %37 = vector.load %arg7[%c0_71, %c48] : memref<64x180xbf16, #tpu.memory_space<vmem>>, vector<64x16xbf16>
    tpu.vector_store %arg7[%c0_71, %c48], %36 {strides = array<i32>} : memref<64x180xbf16, #tpu.memory_space<vmem>>, vector<64x16xbf16>,
    %c0_72 = arith.constant 0 : index
    %c1_73 = arith.constant 1 : index
    %c1_74 = arith.constant 1 : index
    %c0_75 = arith.constant 0 : index
    %38 = vector.load %arg5[%c0_72, %c1_73, %c1_74, %c0_75] : memref<1x10x10x16xf32, #tpu.memory_space<vmem>>, vector<1x8x8x16xf32>
    %39 = vector.shape_cast %38 : vector<1x8x8x16xf32> to vector<64x16xf32>
    %40 = arith.truncf %39 : vector<64x16xf32> to vector<64x16xbf16>
    %c0_76 = arith.constant 0 : index
    %c64 = arith.constant 64 : index
    %41 = vector.load %arg7[%c0_76, %c64] : memref<64x180xbf16, #tpu.memory_space<vmem>>, vector<64x16xbf16>
    tpu.vector_store %arg7[%c0_76, %c64], %40 {strides = array<i32>} : memref<64x180xbf16, #tpu.memory_space<vmem>>, vector<64x16xbf16>,
    %c0_77 = arith.constant 0 : index
    %c1_78 = arith.constant 1 : index
    %c2_79 = arith.constant 2 : index
    %c0_80 = arith.constant 0 : index
    %42 = vector.load %arg5[%c0_77, %c1_78, %c2_79, %c0_80] : memref<1x10x10x16xf32, #tpu.memory_space<vmem>>, vector<1x8x8x16xf32>
    %43 = vector.shape_cast %42 : vector<1x8x8x16xf32> to vector<64x16xf32>
    %44 = arith.truncf %43 : vector<64x16xf32> to vector<64x16xbf16>
    %c0_81 = arith.constant 0 : index
    %c80 = arith.constant 80 : index
    %45 = vector.load %arg7[%c0_81, %c80] : memref<64x180xbf16, #tpu.memory_space<vmem>>, vector<64x16xbf16>
    tpu.vector_store %arg7[%c0_81, %c80], %44 {strides = array<i32>} : memref<64x180xbf16, #tpu.memory_space<vmem>>, vector<64x16xbf16>,
    %c0_82 = arith.constant 0 : index
    %c2_83 = arith.constant 2 : index
    %c0_84 = arith.constant 0 : index
    %c0_85 = arith.constant 0 : index
    %46 = vector.load %arg5[%c0_82, %c2_83, %c0_84, %c0_85] : memref<1x10x10x16xf32, #tpu.memory_space<vmem>>, vector<1x8x8x16xf32>
    %47 = vector.shape_cast %46 : vector<1x8x8x16xf32> to vector<64x16xf32>
    %48 = arith.truncf %47 : vector<64x16xf32> to vector<64x16xbf16>
    %c0_86 = arith.constant 0 : index
    %c96 = arith.constant 96 : index
    %49 = vector.load %arg7[%c0_86, %c96] : memref<64x180xbf16, #tpu.memory_space<vmem>>, vector<64x16xbf16>
    tpu.vector_store %arg7[%c0_86, %c96], %48 {strides = array<i32>} : memref<64x180xbf16, #tpu.memory_space<vmem>>, vector<64x16xbf16>,
    %c0_87 = arith.constant 0 : index
    %c2_88 = arith.constant 2 : index
    %c1_89 = arith.constant 1 : index
    %c0_90 = arith.constant 0 : index
    %50 = vector.load %arg5[%c0_87, %c2_88, %c1_89, %c0_90] : memref<1x10x10x16xf32, #tpu.memory_space<vmem>>, vector<1x8x8x16xf32>
    %51 = vector.shape_cast %50 : vector<1x8x8x16xf32> to vector<64x16xf32>
    %52 = arith.truncf %51 : vector<64x16xf32> to vector<64x16xbf16>
    %c0_91 = arith.constant 0 : index
    %c112 = arith.constant 112 : index
    %53 = vector.load %arg7[%c0_91, %c112] : memref<64x180xbf16, #tpu.memory_space<vmem>>, vector<64x16xbf16>
    tpu.vector_store %arg7[%c0_91, %c112], %52 {strides = array<i32>} : memref<64x180xbf16, #tpu.memory_space<vmem>>, vector<64x16xbf16>,
    %c0_92 = arith.constant 0 : index
    %c2_93 = arith.constant 2 : index
    %c2_94 = arith.constant 2 : index
    %c0_95 = arith.constant 0 : index
    %54 = vector.load %arg5[%c0_92, %c2_93, %c2_94, %c0_95] : memref<1x10x10x16xf32, #tpu.memory_space<vmem>>, vector<1x8x8x16xf32>
    %55 = vector.shape_cast %54 : vector<1x8x8x16xf32> to vector<64x16xf32>
    %56 = arith.truncf %55 : vector<64x16xf32> to vector<64x16xbf16>
    %c0_96 = arith.constant 0 : index
    %c128 = arith.constant 128 : index
    %57 = vector.load %arg7[%c0_96, %c128] : memref<64x180xbf16, #tpu.memory_space<vmem>>, vector<64x16xbf16>
    tpu.vector_store %arg7[%c0_96, %c128], %56 {strides = array<i32>} : memref<64x180xbf16, #tpu.memory_space<vmem>>, vector<64x16xbf16>,
    %c0_97 = arith.constant 0 : index
    %c0_98 = arith.constant 0 : index
    %c0_99 = arith.constant 0 : index
    %c0_100 = arith.constant 0 : index
    %58 = vector.load %arg6[%c0_97, %c0_98, %c0_99, %c0_100] : memref<1x10x10x4xf32, #tpu.memory_space<vmem>>, vector<1x8x8x4xf32>
    %59 = vector.shape_cast %58 : vector<1x8x8x4xf32> to vector<64x4xf32>
    %60 = arith.truncf %59 : vector<64x4xf32> to vector<64x4xbf16>
    %c0_101 = arith.constant 0 : index
    %c144 = arith.constant 144 : index
    %61 = vector.load %arg7[%c0_101, %c144] : memref<64x180xbf16, #tpu.memory_space<vmem>>, vector<64x4xbf16>
    tpu.vector_store %arg7[%c0_101, %c144], %60 {strides = array<i32>} : memref<64x180xbf16, #tpu.memory_space<vmem>>, vector<64x4xbf16>,
    %c0_102 = arith.constant 0 : index
    %c0_103 = arith.constant 0 : index
    %c1_104 = arith.constant 1 : index
    %c0_105 = arith.constant 0 : index
    %62 = vector.load %arg6[%c0_102, %c0_103, %c1_104, %c0_105] : memref<1x10x10x4xf32, #tpu.memory_space<vmem>>, vector<1x8x8x4xf32>
    %63 = vector.shape_cast %62 : vector<1x8x8x4xf32> to vector<64x4xf32>
    %64 = arith.truncf %63 : vector<64x4xf32> to vector<64x4xbf16>
    %c0_106 = arith.constant 0 : index
    %c148 = arith.constant 148 : index
    %65 = vector.load %arg7[%c0_106, %c148] : memref<64x180xbf16, #tpu.memory_space<vmem>>, vector<64x4xbf16>
    tpu.vector_store %arg7[%c0_106, %c148], %64 {strides = array<i32>} : memref<64x180xbf16, #tpu.memory_space<vmem>>, vector<64x4xbf16>,
    %c0_107 = arith.constant 0 : index
    %c0_108 = arith.constant 0 : index
    %c2_109 = arith.constant 2 : index
    %c0_110 = arith.constant 0 : index
    %66 = vector.load %arg6[%c0_107, %c0_108, %c2_109, %c0_110] : memref<1x10x10x4xf32, #tpu.memory_space<vmem>>, vector<1x8x8x4xf32>
    %67 = vector.shape_cast %66 : vector<1x8x8x4xf32> to vector<64x4xf32>
    %68 = arith.truncf %67 : vector<64x4xf32> to vector<64x4xbf16>
    %c0_111 = arith.constant 0 : index
    %c152 = arith.constant 152 : index
    %69 = vector.load %arg7[%c0_111, %c152] : memref<64x180xbf16, #tpu.memory_space<vmem>>, vector<64x4xbf16>
    tpu.vector_store %arg7[%c0_111, %c152], %68 {strides = array<i32>} : memref<64x180xbf16, #tpu.memory_space<vmem>>, vector<64x4xbf16>,
    %c0_112 = arith.constant 0 : index
    %c1_113 = arith.constant 1 : index
    %c0_114 = arith.constant 0 : index
    %c0_115 = arith.constant 0 : index
    %70 = vector.load %arg6[%c0_112, %c1_113, %c0_114, %c0_115] : memref<1x10x10x4xf32, #tpu.memory_space<vmem>>, vector<1x8x8x4xf32>
    %71 = vector.shape_cast %70 : vector<1x8x8x4xf32> to vector<64x4xf32>
    %72 = arith.truncf %71 : vector<64x4xf32> to vector<64x4xbf16>
    %c0_116 = arith.constant 0 : index
    %c156 = arith.constant 156 : index
    %73 = vector.load %arg7[%c0_116, %c156] : memref<64x180xbf16, #tpu.memory_space<vmem>>, vector<64x4xbf16>
    tpu.vector_store %arg7[%c0_116, %c156], %72 {strides = array<i32>} : memref<64x180xbf16, #tpu.memory_space<vmem>>, vector<64x4xbf16>,
    %c0_117 = arith.constant 0 : index
    %c1_118 = arith.constant 1 : index
    %c1_119 = arith.constant 1 : index
    %c0_120 = arith.constant 0 : index
    %74 = vector.load %arg6[%c0_117, %c1_118, %c1_119, %c0_120] : memref<1x10x10x4xf32, #tpu.memory_space<vmem>>, vector<1x8x8x4xf32>
    %75 = vector.shape_cast %74 : vector<1x8x8x4xf32> to vector<64x4xf32>
    %76 = arith.truncf %75 : vector<64x4xf32> to vector<64x4xbf16>
    %c0_121 = arith.constant 0 : index
    %c160 = arith.constant 160 : index
    %77 = vector.load %arg7[%c0_121, %c160] : memref<64x180xbf16, #tpu.memory_space<vmem>>, vector<64x4xbf16>
    tpu.vector_store %arg7[%c0_121, %c160], %76 {strides = array<i32>} : memref<64x180xbf16, #tpu.memory_space<vmem>>, vector<64x4xbf16>,
    %c0_122 = arith.constant 0 : index
    %c1_123 = arith.constant 1 : index
    %c2_124 = arith.constant 2 : index
    %c0_125 = arith.constant 0 : index
    %78 = vector.load %arg6[%c0_122, %c1_123, %c2_124, %c0_125] : memref<1x10x10x4xf32, #tpu.memory_space<vmem>>, vector<1x8x8x4xf32>
    %79 = vector.shape_cast %78 : vector<1x8x8x4xf32> to vector<64x4xf32>
    %80 = arith.truncf %79 : vector<64x4xf32> to vector<64x4xbf16>
    %c0_126 = arith.constant 0 : index
    %c164 = arith.constant 164 : index
    %81 = vector.load %arg7[%c0_126, %c164] : memref<64x180xbf16, #tpu.memory_space<vmem>>, vector<64x4xbf16>
    tpu.vector_store %arg7[%c0_126, %c164], %80 {strides = array<i32>} : memref<64x180xbf16, #tpu.memory_space<vmem>>, vector<64x4xbf16>,
    %c0_127 = arith.constant 0 : index
    %c2_128 = arith.constant 2 : index
    %c0_129 = arith.constant 0 : index
    %c0_130 = arith.constant 0 : index
    %82 = vector.load %arg6[%c0_127, %c2_128, %c0_129, %c0_130] : memref<1x10x10x4xf32, #tpu.memory_space<vmem>>, vector<1x8x8x4xf32>
    %83 = vector.shape_cast %82 : vector<1x8x8x4xf32> to vector<64x4xf32>
    %84 = arith.truncf %83 : vector<64x4xf32> to vector<64x4xbf16>
    %c0_131 = arith.constant 0 : index
    %c168 = arith.constant 168 : index
    %85 = vector.load %arg7[%c0_131, %c168] : memref<64x180xbf16, #tpu.memory_space<vmem>>, vector<64x4xbf16>
    tpu.vector_store %arg7[%c0_131, %c168], %84 {strides = array<i32>} : memref<64x180xbf16, #tpu.memory_space<vmem>>, vector<64x4xbf16>,
    %c0_132 = arith.constant 0 : index
    %c2_133 = arith.constant 2 : index
    %c1_134 = arith.constant 1 : index
    %c0_135 = arith.constant 0 : index
    %86 = vector.load %arg6[%c0_132, %c2_133, %c1_134, %c0_135] : memref<1x10x10x4xf32, #tpu.memory_space<vmem>>, vector<1x8x8x4xf32>
    %87 = vector.shape_cast %86 : vector<1x8x8x4xf32> to vector<64x4xf32>
    %88 = arith.truncf %87 : vector<64x4xf32> to vector<64x4xbf16>
    %c0_136 = arith.constant 0 : index
    %c172 = arith.constant 172 : index
    %89 = vector.load %arg7[%c0_136, %c172] : memref<64x180xbf16, #tpu.memory_space<vmem>>, vector<64x4xbf16>
    tpu.vector_store %arg7[%c0_136, %c172], %88 {strides = array<i32>} : memref<64x180xbf16, #tpu.memory_space<vmem>>, vector<64x4xbf16>,
    %c0_137 = arith.constant 0 : index
    %c2_138 = arith.constant 2 : index
    %c2_139 = arith.constant 2 : index
    %c0_140 = arith.constant 0 : index
    %90 = vector.load %arg6[%c0_137, %c2_138, %c2_139, %c0_140] : memref<1x10x10x4xf32, #tpu.memory_space<vmem>>, vector<1x8x8x4xf32>
    %91 = vector.shape_cast %90 : vector<1x8x8x4xf32> to vector<64x4xf32>
    %92 = arith.truncf %91 : vector<64x4xf32> to vector<64x4xbf16>
    %c0_141 = arith.constant 0 : index
    %c176 = arith.constant 176 : index
    %93 = vector.load %arg7[%c0_141, %c176] : memref<64x180xbf16, #tpu.memory_space<vmem>>, vector<64x4xbf16>
    tpu.vector_store %arg7[%c0_141, %c176], %92 {strides = array<i32>} : memref<64x180xbf16, #tpu.memory_space<vmem>>, vector<64x4xbf16>,
    %c0_142 = arith.constant 0 : index
    %c0_143 = arith.constant 0 : index
    %94 = vector.load %arg7[%c0_142, %c0_143] : memref<64x180xbf16, #tpu.memory_space<vmem>>, vector<64x180xbf16>
    %c0_144 = arith.constant 0 : index
    %c0_145 = arith.constant 0 : index
    %95 = vector.load %arg3[%c0_144, %c0_145] : memref<180x128xbf16, #tpu.memory_space<vmem>>, vector<180x128xbf16>
    %cst_146 = arith.constant dense<0.000000e+00> : vector<64x128xf32>
    %96 = tpu.matmul %94, %95, %cst_146 {dimension_numbers = #tpu.dot_dimension_numbers<[1], [0], [0], [1], [0, 0, 1, 1], [], []>} : vector<64x180xbf16>, vector<180x128xbf16>, vector<64x128xf32> -> vector<64x128xf32>
    %97 = vector.shape_cast %96 : vector<64x128xf32> to vector<1x64x128xf32>
    %c0_147 = arith.constant 0 : index
    %c0_148 = arith.constant 0 : index
    %c0_149 = arith.constant 0 : index
    %98 = vector.load %arg4[%c0_147, %c0_148, %c0_149] : memref<1x64x128xf32, #tpu.memory_space<vmem>>, vector<1x64x128xf32>
    tpu.vector_store %arg4[%c0_147, %c0_148, %c0_149], %97 {strides = array<i32>} : memref<1x64x128xf32, #tpu.memory_space<vmem>>, vector<1x64x128xf32>,
    return
  }
  func.func @transform_0(%arg0: i32) -> (i32, i32, i32, i32) {
    %c0_i32 = arith.constant 0 : i32
    %c0_i32_0 = arith.constant 0 : i32
    %c0_i32_1 = arith.constant 0 : i32
    %c0_i32_2 = arith.constant 0 : i32
    return %arg0, %c0_i32, %c0_i32_0, %c0_i32_1 : i32, i32, i32, i32
  }
  func.func @transform_1(%arg0: i32) -> (i32, i32, i32, i32) {
    %c0_i32 = arith.constant 0 : i32
    %c0_i32_0 = arith.constant 0 : i32
    %c0_i32_1 = arith.constant 0 : i32
    %c0_i32_2 = arith.constant 0 : i32
    return %arg0, %c0_i32, %c0_i32_0, %c0_i32_1 : i32, i32, i32, i32
  }
  func.func @transform_2(%arg0: i32) -> (i32, i32) {
    %c0_i32 = arith.constant 0 : i32
    %c0_i32_0 = arith.constant 0 : i32
    %c0_i32_1 = arith.constant 0 : i32
    return %c0_i32, %c0_i32_0 : i32, i32
  }
  func.func @transform_3(%arg0: i32) -> (i32, i32, i32) {
    %c0_i32 = arith.constant 0 : i32
    %c0_i32_0 = arith.constant 0 : i32
    %c0_i32_1 = arith.constant 0 : i32
    return %arg0, %c0_i32, %c0_i32_0 : i32, i32, i32
  }
}

</mosaic_0001>

<llo_original>
// kernel: octave_conv_forward.1
$region0: #{octave_conv_forward.1}
  #allocation0 [shape = 'u32[]', space=smem, size = 0x4, offset = 0x4, fixed_abs, tag = 'smem constant byte address 0x4 - core index']
  #allocation1 [shape = 'u32[144,128]{1,0:T(1,128)}', space=vmem, size = 0x12000, scoped, tag = 'internal scratch']
  #allocation2 [shape = 'f32[1,10,10,16]{3,2,1,0:T(8,128)}', space=vmem, size = 0x14000, scoped, tag = 'scratch operand']
  #allocation3 [shape = 'f32[1,10,10,4]{3,2,1,0:T(8,128)}', space=vmem, size = 0x14000, scoped, tag = 'scratch operand']
  #allocation4 [shape = 'bf16[64,180]{1,0:T(16,128)(2,1)}', space=vmem, size = 0x8000, scoped, tag = 'scratch operand']
  %s0 = inlined_call_operand.vmem [shape: bf16[2,8,8,16], index: 0, kind: input, shape index: {}]
  %s1 = inlined_call_operand.vmem [shape: bf16[2,8,8,4], index: 1, kind: input, shape index: {}]
  %s2 = inlined_call_operand.vmem [shape: bf16[180,128], index: 2, kind: input, shape index: {}]
  %s3 = inlined_call_operand.vmem [shape: f32[2,64,128], index: 3, kind: output, shape index: {}]
  %s4 = sld [smem:[#allocation0]]
  $region45: #{octave_conv_forward.1} parent=0
    _
  %s6 = ssub.s32 1, %s4
  %s7 = scalar_select 0, %s6, %s4
  loop: start=0, step=1, limit=4
  $region2: #{octave_conv_forward.1} parent=0 // loop_pre_header
    _
  $region3: #{octave_conv_forward.1} parent=0 // loop_header
    %s9 = sphi 0, %s13
    %p10 = scmp.ge.s32.totalorder %s9, 4
    %s19 = sphi 0, %s21
    %s22 = sphi 0, %s19
    %s23 = sphi 0, %s22
    %s39 = sphi 0, %s23
    %s45 = sphi 0, %s47
    %s48 = sphi 0, %s45
    %s49 = sphi 0, %s48
    %s65 = sphi 0, %s49
    %s69 = sphi 0, %s69
    %s71 = sphi 0, %s69
    %s72 = sphi 0, %s71
    %s86 = sphi 0, %s72
    %s92 = sphi 0, %s94
    %s95 = sphi 0, %s92
    %s96 = sphi 0, %s95
    %s112 = sphi 0, %s96
  $region4: #{octave_conv_forward.1} parent=0 // loop_header_branch
    %12 = sbr.rel (%p10) target = $region8
  $region5: #{octave_conv_forward.1} parent=0 // loop_body
    %s14 = ssub.s32 %s9, 1
    %s15 = ssub.s32 %s9, 2
    %s16 = sadd.s32 %s9, 1
    %s17 = ssub.s32 %s9, %s16
    %p18 = scmp.eq.s32.totalorder %s17, 0
    %s20 = sadd.s32 %s19, 1
    %s21 = scalar_select %p18, %s19, %s20
    %p24 = pneg %p18
    %p25 = scmp.eq.s32.totalorder %s9, 1
    %p26 = por %p24, %p25
    %p27 = scmp.ne.s32.totalorder %s19, %s22
    %p28 = scmp.eq.s32.totalorder %s9, 0
    %p29 = por %p27, %p28
    %p30 = scmp.ne.s32.totalorder %s19, %s22
    %p31 = scmp.eq.s32.totalorder %s14, 1
    %p32 = por %p30, %p31
    %p33 = scmp.ne.s32.totalorder %s22, %s23
    %p34 = scmp.eq.s32.totalorder %s14, 0
    %p35 = por %p33, %p34
    %p36 = scmp.ne.s32.totalorder %s22, %s23
    %p37 = scmp.eq.s32.totalorder %s15, 1
    %p38 = por %p36, %p37
    %p40 = scmp.ne.s32.totalorder %s23, %s39
    %p41 = scmp.eq.s32.totalorder %s15, 0
    %p42 = por %p40, %p41
    %s43 = ssub.s32 %s9, %s16
    %p44 = scmp.eq.s32.totalorder %s43, 0
    %s46 = sadd.s32 %s45, 1
    %s47 = scalar_select %p44, %s45, %s46
    %p50 = pneg %p44
    %p51 = scmp.eq.s32.totalorder %s9, 1
    %p52 = por %p50, %p51
    %p53 = scmp.ne.s32.totalorder %s45, %s48
    %p54 = scmp.eq.s32.totalorder %s9, 0
    %p55 = por %p53, %p54
    %p56 = scmp.ne.s32.totalorder %s45, %s48
    %p57 = scmp.eq.s32.totalorder %s14, 1
    %p58 = por %p56, %p57
    %p59 = scmp.ne.s32.totalorder %s48, %s49
    %p60 = scmp.eq.s32.totalorder %s14, 0
    %p61 = por %p59, %p60
    %p62 = scmp.ne.s32.totalorder %s48, %s49
    %p63 = scmp.eq.s32.totalorder %s15, 1
    %p64 = por %p62, %p63
    %p66 = scmp.ne.s32.totalorder %s49, %s65
    %p67 = scmp.eq.s32.totalorder %s15, 0
    %p68 = por %p66, %p67
    %s70 = sadd.s32 %s69, 1
    %p73 = scmp.eq.s32.totalorder %s9, 1
    %p74 = scmp.ne.s32.totalorder %s69, %s71
    %p75 = scmp.eq.s32.totalorder %s9, 0
    %p76 = por %p74, %p75
    %p77 = scmp.ne.s32.totalorder %s69, %s71
    %p78 = scmp.eq.s32.totalorder %s14, 1
    %p79 = por %p77, %p78
    %p80 = scmp.ne.s32.totalorder %s71, %s72
    %p81 = scmp.eq.s32.totalorder %s14, 0
    %p82 = por %p80, %p81
    %p83 = scmp.ne.s32.totalorder %s71, %s72
    %p84 = scmp.eq.s32.totalorder %s15, 1
    %p85 = por %p83, %p84
    %p87 = scmp.ne.s32.totalorder %s72, %s86
    %p88 = scmp.eq.s32.totalorder %s15, 0
    %p89 = por %p87, %p88
    %s90 = ssub.s32 %s9, %s16
    %p91 = scmp.eq.s32.totalorder %s90, 0
    %s93 = sadd.s32 %s92, 1
    %s94 = scalar_select %p91, %s92, %s93
    %p97 = pneg %p91
    %p98 = scmp.eq.s32.totalorder %s9, 1
    %p99 = por %p97, %p98
    %p100 = scmp.ne.s32.totalorder %s92, %s95
    %p101 = scmp.eq.s32.totalorder %s9, 0
    %p102 = por %p100, %p101
    %p103 = scmp.ne.s32.totalorder %s92, %s95
    %p104 = scmp.eq.s32.totalorder %s14, 1
    %p105 = por %p103, %p104
    %p106 = scmp.ne.s32.totalorder %s95, %s96
    %p107 = scmp.eq.s32.totalorder %s14, 0
    %p108 = por %p106, %p107
    %p109 = scmp.ne.s32.totalorder %s95, %s96
    %p110 = scmp.eq.s32.totalorder %s15, 1
    %p111 = por %p109, %p110
    %p113 = scmp.ne.s32.totalorder %s96, %s112
    %p114 = scmp.eq.s32.totalorder %s15, 0
    %p115 = por %p113, %p114
    %p116 = scmp.le.s32.totalorder 1, %s9
    %p117 = scmp.lt.s32.totalorder %s9, 3
    %p118 = pnand %p116, %p117
    %p119 = pneg %p118
    // Predicated region
    $region9: #{octave_conv_forward.1} parent=5 // pred_check
      _
    $region10: #{octave_conv_forward.1} parent=5 // pred_check_branch
      %121 = sbr.rel (%p118) target = $region12
    $region11: #{octave_conv_forward.1} parent=5 // pred_region
      %s122 = ssub.s32 %s9, 1
      // Predicated region
      $region13: #{octave_conv_forward.1} parent=11 // pred_check
        %p123 = pneg %p82
      $region14: #{octave_conv_forward.1} parent=11 // pred_check_branch
        %125 = sbr.rel (%p123) target = $region16
      $region15: #{octave_conv_forward.1} parent=11 // pred_region
        _
      $region16: #{octave_conv_forward.1} parent=11 // pred_fallthru
        _
    $region12: #{octave_conv_forward.1} parent=5 // pred_fallthru
      _
    %p126 = scmp.lt.s32.totalorder %s9, 2
    // Predicated region
    $region17: #{octave_conv_forward.1} parent=5 // pred_check
      %p127 = pneg %p126
    $region18: #{octave_conv_forward.1} parent=5 // pred_check_branch
      %129 = sbr.rel (%p127) target = $region20
    $region19: #{octave_conv_forward.1} parent=5 // pred_region
      // Predicated region
      $region21: #{octave_conv_forward.1} parent=19 // pred_check
        %p130 = pneg %p29
      $region22: #{octave_conv_forward.1} parent=19 // pred_check_branch
        %132 = sbr.rel (%p130) target = $region24
      $region23: #{octave_conv_forward.1} parent=19 // pred_region
        %p133 = scmp.lt.s32.totalorder %s9, 1
        %s134 = scalar_select %p133, %s9, 1
        %s135 = smul.addr %s134, 8
        %s136 = smul.addr %s135, 4
        %s137 = scalar_lea.vmem %s0, %s136
      $region24: #{octave_conv_forward.1} parent=19 // pred_fallthru
        _
      // Predicated region
      $region25: #{octave_conv_forward.1} parent=19 // pred_check
        %p138 = pneg %p55
      $region26: #{octave_conv_forward.1} parent=19 // pred_check_branch
        %140 = sbr.rel (%p138) target = $region28
      $region27: #{octave_conv_forward.1} parent=19 // pred_region
        %p141 = scmp.lt.s32.totalorder %s9, 1
        %s142 = scalar_select %p141, %s9, 1
        %s143 = smul.addr %s142, 8
        %s144 = smul.addr %s143, 4
        %s145 = scalar_lea.vmem %s1, %s144
      $region28: #{octave_conv_forward.1} parent=19 // pred_fallthru
        _
    $region20: #{octave_conv_forward.1} parent=5 // pred_fallthru
      _
    %p146 = scmp.le.s32.totalorder 1, %s9
    %p147 = scmp.lt.s32.totalorder %s9, 3
    %p148 = pnand %p146, %p147
    %p149 = pneg %p148
    // Predicated region
    $region29: #{octave_conv_forward.1} parent=5 // pred_check
      _
    $region30: #{octave_conv_forward.1} parent=5 // pred_check_branch
      %151 = sbr.rel (%p148) target = $region32
    $region31: #{octave_conv_forward.1} parent=5 // pred_region
      %s152 = ssub.s32 %s9, 1
      %p153 = scmp.lt.s32.totalorder %s14, 1
      %s154 = scalar_select %p153, %s14, 1
      %s155 = smul.addr %s154, 8
      %s156 = smul.addr %s155, 4
      %s157 = scalar_lea.vmem %s0, %s156
      %p158 = pneg %p35
      %p159 = pneg %p32
      %p160 = scmp.lt.s32.totalorder %s14, 1
      %s161 = scalar_select %p160, %s14, 1
      %s162 = smul.addr %s161, 8
      %s163 = smul.addr %s162, 4
      %s164 = scalar_lea.vmem %s1, %s163
      %p165 = pneg %p61
      %p166 = pneg %p58
      %p167 = pneg %p82
      %p168 = pneg %p79
      %p169 = pneg %p108
      %p170 = pneg %p105
      %p171 = scmp.lt.s32.totalorder %s14, 1
      %s172 = scalar_select %p171, %s14, 1
      %s173 = smul.addr %s172, 8
      %s174 = smul.addr %s173, 8
      %s175 = scalar_lea.vmem %s3, %s174
      %p176 = scmp.lt.s32.totalorder %s14, 1
      %s177 = scalar_select %p176, %s14, 1
      %s178 = smul.addr %s177, 8
      %s179 = smul.addr %s178, 4
      %s180 = scalar_lea.vmem %s0, %s179
      %p181 = scmp.lt.s32.totalorder %s14, 1
      %s182 = scalar_select %p181, %s14, 1
      %s183 = smul.addr %s182, 8
      %s184 = smul.addr %s183, 4
      %s185 = scalar_lea.vmem %s1, %s184
      %p186 = scmp.lt.s32.totalorder %s14, 1
      %s187 = scalar_select %p186, %s14, 1
      %s188 = smul.addr %s187, 8
      %s189 = smul.addr %s188, 8
      %s190 = scalar_lea.vmem %s3, %s189
      %vm192 = vcmask 130048
      %193 = vst.msk [vmem:[#allocation2] sm:$0xff] %vm192, 0.0
      %vm194 = vcmask 123904
      %195 = vst.msk [vmem:[#allocation2 + $0x8] sm:$0x3] %vm194, 0.0
      %s196 = scalar_lea.vmem [#allocation2], 144
      %197 = vst.msk [vmem:[%s196] sm:$0xff] %vm192, 0.0
      %198 = vst.msk [vmem:[%s196 + $0x8] sm:$0x3] %vm194, 0.0
      %vm199 = vcmask 122880
      %200 = vst.msk [vmem:[#allocation2] sm:$0x1] %vm199, 0.0
      %201 = vst.msk [vmem:[#allocation2 + $0x10] sm:$0x1] %vm199, 0.0
      %202 = vst.msk [vmem:[#allocation2 + $0x20] sm:$0x1] %vm199, 0.0
      %203 = vst.msk [vmem:[#allocation2 + $0x30] sm:$0x1] %vm199, 0.0
      %204 = vst.msk [vmem:[#allocation2 + $0x40] sm:$0x1] %vm199, 0.0
      %205 = vst.msk [vmem:[#allocation2 + $0x50] sm:$0x1] %vm199, 0.0
      %206 = vst.msk [vmem:[#allocation2 + $0x60] sm:$0x1] %vm199, 0.0
      %207 = vst.msk [vmem:[#allocation2 + $0x70] sm:$0x1] %vm199, 0.0
      %208 = vst.msk [vmem:[#allocation2 + $0x80] sm:$0x1] %vm199, 0.0
      %209 = vst.msk [vmem:[#allocation2 + $0x90] sm:$0x1] %vm199, 0.0
      %210 = vst.msk [vmem:[#allocation2 + $0x9] sm:$0x1] %vm199, 0.0
      %211 = vst.msk [vmem:[#allocation2 + $0x19] sm:$0x1] %vm199, 0.0
      %212 = vst.msk [vmem:[#allocation2 + $0x29] sm:$0x1] %vm199, 0.0
      %213 = vst.msk [vmem:[#allocation2 + $0x39] sm:$0x1] %vm199, 0.0
      %214 = vst.msk [vmem:[#allocation2 + $0x49] sm:$0x1] %vm199, 0.0
      %215 = vst.msk [vmem:[#allocation2 + $0x59] sm:$0x1] %vm199, 0.0
      %216 = vst.msk [vmem:[#allocation2 + $0x69] sm:$0x1] %vm199, 0.0
      %217 = vst.msk [vmem:[#allocation2 + $0x79] sm:$0x1] %vm199, 0.0
      %218 = vst.msk [vmem:[#allocation2 + $0x89] sm:$0x1] %vm199, 0.0
      %219 = vst.msk [vmem:[#allocation2 + $0x99] sm:$0x1] %vm199, 0.0
      %vm220 = vcmask 31744
      %221 = vst.msk [vmem:[#allocation3] sm:$0xff] %vm220, 0.0
      %vm222 = vcmask 25600
      %223 = vst.msk [vmem:[#allocation3 + $0x8] sm:$0x3] %vm222, 0.0
      %s224 = scalar_lea.vmem [#allocation3], 144
      %225 = vst.msk [vmem:[%s224] sm:$0xff] %vm220, 0.0
      %226 = vst.msk [vmem:[%s224 + $0x8] sm:$0x3] %vm222, 0.0
      %vm227 = vcmask 24576
      %228 = vst.msk [vmem:[#allocation3] sm:$0x1] %vm227, 0.0
      %229 = vst.msk [vmem:[#allocation3 + $0x10] sm:$0x1] %vm227, 0.0
      %230 = vst.msk [vmem:[#allocation3 + $0x20] sm:$0x1] %vm227, 0.0
      %231 = vst.msk [vmem:[#allocation3 + $0x30] sm:$0x1] %vm227, 0.0
      %232 = vst.msk [vmem:[#allocation3 + $0x40] sm:$0x1] %vm227, 0.0
      %233 = vst.msk [vmem:[#allocation3 + $0x50] sm:$0x1] %vm227, 0.0
      %234 = vst.msk [vmem:[#allocation3 + $0x60] sm:$0x1] %vm227, 0.0
      %235 = vst.msk [vmem:[#allocation3 + $0x70] sm:$0x1] %vm227, 0.0
      %236 = vst.msk [vmem:[#allocation3 + $0x80] sm:$0x1] %vm227, 0.0
      %237 = vst.msk [vmem:[#allocation3 + $0x90] sm:$0x1] %vm227, 0.0
      %238 = vst.msk [vmem:[#allocation3 + $0x9] sm:$0x1] %vm227, 0.0
      %239 = vst.msk [vmem:[#allocation3 + $0x19] sm:$0x1] %vm227, 0.0
      %240 = vst.msk [vmem:[#allocation3 + $0x29] sm:$0x1] %vm227, 0.0
      %241 = vst.msk [vmem:[#allocation3 + $0x39] sm:$0x1] %vm227, 0.0
      %242 = vst.msk [vmem:[#allocation3 + $0x49] sm:$0x1] %vm227, 0.0
      %243 = vst.msk [vmem:[#allocation3 + $0x59] sm:$0x1] %vm227, 0.0
      %244 = vst.msk [vmem:[#allocation3 + $0x69] sm:$0x1] %vm227, 0.0
      %245 = vst.msk [vmem:[#allocation3 + $0x79] sm:$0x1] %vm227, 0.0
      %246 = vst.msk [vmem:[#allocation3 + $0x89] sm:$0x1] %vm227, 0.0
      %247 = vst.msk [vmem:[#allocation3 + $0x99] sm:$0x1] %vm227, 0.0
      %v248 = vld [vmem:[%s180] sm:$0xf]
      %v249 = vld [vmem:[%s180 + $0x4] sm:$0xf]
      %v250 = vld [vmem:[%s180 + $0x8] sm:$0xf]
      %v251 = vld [vmem:[%s180 + $0xc] sm:$0xf]
      %v252 = vld [vmem:[%s180 + $0x10] sm:$0xf]
      %v253 = vld [vmem:[%s180 + $0x14] sm:$0xf]
      %v254 = vld [vmem:[%s180 + $0x18] sm:$0xf]
      %v255 = vld [vmem:[%s180 + $0x1c] sm:$0xf]
      %v256 = vunpack.c.l.bf16 %v248
      %v257 = vunpack.c.l.bf16 %v249
      %v258 = vunpack.c.l.bf16 %v250
      %v259 = vunpack.c.l.bf16 %v251
      %v260 = vunpack.c.l.bf16 %v252
      %v261 = vunpack.c.l.bf16 %v253
      %v262 = vunpack.c.l.bf16 %v254
      %v263 = vunpack.c.l.bf16 %v255
      %s264 = scalar_lea.vmem [#allocation2], 16
      %265 = vst.msk [vmem:[%s264 + $0x1] sm:$0xff] %vm192, %v256
      %266 = vst.msk [vmem:[%s264 + $0x11] sm:$0xff] %vm192, %v257
      %267 = vst.msk [vmem:[%s264 + $0x21] sm:$0xff] %vm192, %v258
      %268 = vst.msk [vmem:[%s264 + $0x31] sm:$0xff] %vm192, %v259
      %269 = vst.msk [vmem:[%s264 + $0x41] sm:$0xff] %vm192, %v260
      %270 = vst.msk [vmem:[%s264 + $0x51] sm:$0xff] %vm192, %v261
      %271 = vst.msk [vmem:[%s264 + $0x61] sm:$0xff] %vm192, %v262
      %272 = vst.msk [vmem:[%s264 + $0x71] sm:$0xff] %vm192, %v263
      %v273 = vld [vmem:[%s185] sm:$0xf]
      %v274 = vld [vmem:[%s185 + $0x4] sm:$0xf]
      %v275 = vld [vmem:[%s185 + $0x8] sm:$0xf]
      %v276 = vld [vmem:[%s185 + $0xc] sm:$0xf]
      %v277 = vld [vmem:[%s185 + $0x10] sm:$0xf]
      %v278 = vld [vmem:[%s185 + $0x14] sm:$0xf]
      %v279 = vld [vmem:[%s185 + $0x18] sm:$0xf]
      %v280 = vld [vmem:[%s185 + $0x1c] sm:$0xf]
      %v281 = vunpack.c.l.bf16 %v273
      %v282 = vunpack.c.l.bf16 %v274
      %v283 = vunpack.c.l.bf16 %v275
      %v284 = vunpack.c.l.bf16 %v276
      %v285 = vunpack.c.l.bf16 %v277
      %v286 = vunpack.c.l.bf16 %v278
      %v287 = vunpack.c.l.bf16 %v279
      %v288 = vunpack.c.l.bf16 %v280
      %s289 = scalar_lea.vmem [#allocation3], 16
      %290 = vst.msk [vmem:[%s289 + $0x1] sm:$0xff] %vm220, %v281
      %291 = vst.msk [vmem:[%s289 + $0x11] sm:$0xff] %vm220, %v282
      %292 = vst.msk [vmem:[%s289 + $0x21] sm:$0xff] %vm220, %v283
      %293 = vst.msk [vmem:[%s289 + $0x31] sm:$0xff] %vm220, %v284
      %294 = vst.msk [vmem:[%s289 + $0x41] sm:$0xff] %vm220, %v285
      %295 = vst.msk [vmem:[%s289 + $0x51] sm:$0xff] %vm220, %v286
      %296 = vst.msk [vmem:[%s289 + $0x61] sm:$0xff] %vm220, %v287
      %297 = vst.msk [vmem:[%s289 + $0x71] sm:$0xff] %vm220, %v288
      %v298 = vld [vmem:[#allocation2] sm:$0xff]
      %v299 = vld [vmem:[#allocation2 + $0x10] sm:$0xff]
      %v300 = vld [vmem:[#allocation2 + $0x20] sm:$0xff]
      %v301 = vld [vmem:[#allocation2 + $0x30] sm:$0xff]
      %v302 = vld [vmem:[#allocation2 + $0x40] sm:$0xff]
      %v303 = vld [vmem:[#allocation2 + $0x50] sm:$0xff]
      %v304 = vld [vmem:[#allocation2 + $0x60] sm:$0xff]
      %v305 = vld [vmem:[#allocation2 + $0x70] sm:$0xff]
      %v306 = vpack.c.bf16 %v299, %v298
      %v307 = vpack.c.bf16 %v301, %v300
      %v308 = vpack.c.bf16 %v303, %v302
      %v309 = vpack.c.bf16 %v305, %v304
      %310 = vst.msk [vmem:[#allocation4] sm:$0xff] %vm192, %v306
      %311 = vst.msk [vmem:[#allocation4 + $0x10] sm:$0xff] %vm192, %v307
      %312 = vst.msk [vmem:[#allocation4 + $0x20] sm:$0xff] %vm192, %v308
      %313 = vst.msk [vmem:[#allocation4 + $0x30] sm:$0xff] %vm192, %v309
      %v314 = vld [vmem:[#allocation2 + $0x1] sm:$0xff]
      %v315 = vld [vmem:[#allocation2 + $0x11] sm:$0xff]
      %v316 = vld [vmem:[#allocation2 + $0x21] sm:$0xff]
      %v317 = vld [vmem:[#allocation2 + $0x31] sm:$0xff]
      %v318 = vld [vmem:[#allocation2 + $0x41] sm:$0xff]
      %v319 = vld [vmem:[#allocation2 + $0x51] sm:$0xff]
      %v320 = vld [vmem:[#allocation2 + $0x61] sm:$0xff]
      %v321 = vld [vmem:[#allocation2 + $0x71] sm:$0xff]
      %v322 = vpack.c.bf16 %v315, %v314
      %v323 = vpack.c.bf16 %v317, %v316
      %v324 = vpack.c.bf16 %v319, %v318
      %v325 = vpack.c.bf16 %v321, %v320
      %330 = vrot.lane.b32.xlu0 %v322, 16
      %v331 = vpop.permute.xlu0 %330
      %332 = vrot.lane.b32.xlu0 %v323, 16
      %v333 = vpop.permute.xlu0 %332
      %334 = vrot.lane.b32.xlu0 %v324, 16
      %v335 = vpop.permute.xlu0 %334
      %336 = vrot.lane.b32.xlu0 %v325, 16
      %v337 = vpop.permute.xlu0 %336
      %vm342 = vcmask 261248
      %343 = vst.msk [vmem:[#allocation4] sm:$0xff] %vm342, %v331
      %344 = vst.msk [vmem:[#allocation4 + $0x10] sm:$0xff] %vm342, %v333
      %345 = vst.msk [vmem:[#allocation4 + $0x20] sm:$0xff] %vm342, %v335
      %346 = vst.msk [vmem:[#allocation4 + $0x30] sm:$0xff] %vm342, %v337
      %v347 = vld [vmem:[#allocation2 + $0x2] sm:$0xff]
      %v348 = vld [vmem:[#allocation2 + $0x12] sm:$0xff]
      %v349 = vld [vmem:[#allocation2 + $0x22] sm:$0xff]
      %v350 = vld [vmem:[#allocation2 + $0x32] sm:$0xff]
      %v351 = vld [vmem:[#allocation2 + $0x42] sm:$0xff]
      %v352 = vld [vmem:[#allocation2 + $0x52] sm:$0xff]
      %v353 = vld [vmem:[#allocation2 + $0x62] sm:$0xff]
      %v354 = vld [vmem:[#allocation2 + $0x72] sm:$0xff]
      %v355 = vpack.c.bf16 %v348, %v347
      %v356 = vpack.c.bf16 %v350, %v349
      %v357 = vpack.c.bf16 %v352, %v351
      %v358 = vpack.c.bf16 %v354, %v353
      %363 = vrot.lane.b32.xlu0 %v355, 32
      %v364 = vpop.permute.xlu0 %363
      %365 = vrot.lane.b32.xlu0 %v356, 32
      %v366 = vpop.permute.xlu0 %365
      %367 = vrot.lane.b32.xlu0 %v357, 32
      %v368 = vpop.permute.xlu0 %367
      %369 = vrot.lane.b32.xlu0 %v358, 32
      %v370 = vpop.permute.xlu0 %369
      %vm375 = vcmask 392448
      %376 = vst.msk [vmem:[#allocation4] sm:$0xff] %vm375, %v364
      %377 = vst.msk [vmem:[#allocation4 + $0x10] sm:$0xff] %vm375, %v366
      %378 = vst.msk [vmem:[#allocation4 + $0x20] sm:$0xff] %vm375, %v368
      %379 = vst.msk [vmem:[#allocation4 + $0x30] sm:$0xff] %vm375, %v370
      %v380 = vld [vmem:[%s264] sm:$0xff]
      %v381 = vld [vmem:[%s264 + $0x10] sm:$0xff]
      %v382 = vld [vmem:[%s264 + $0x20] sm:$0xff]
      %v383 = vld [vmem:[%s264 + $0x30] sm:$0xff]
      %v384 = vld [vmem:[%s264 + $0x40] sm:$0xff]
      %v385 = vld [vmem:[%s264 + $0x50] sm:$0xff]
      %v386 = vld [vmem:[%s264 + $0x60] sm:$0xff]
      %v387 = vld [vmem:[%s264 + $0x70] sm:$0xff]
      %v388 = vpack.c.bf16 %v381, %v380
      %v389 = vpack.c.bf16 %v383, %v382
      %v390 = vpack.c.bf16 %v385, %v384
      %v391 = vpack.c.bf16 %v387, %v386
      %396 = vrot.lane.b32.xlu0 %v388, 48
      %v397 = vpop.permute.xlu0 %396
      %398 = vrot.lane.b32.xlu0 %v389, 48
      %v399 = vpop.permute.xlu0 %398
      %400 = vrot.lane.b32.xlu0 %v390, 48
      %v401 = vpop.permute.xlu0 %400
      %402 = vrot.lane.b32.xlu0 %v391, 48
      %v403 = vpop.permute.xlu0 %402
      %vm408 = vcmask 523648
      %409 = vst.msk [vmem:[#allocation4] sm:$0xff] %vm408, %v397
      %410 = vst.msk [vmem:[#allocation4 + $0x10] sm:$0xff] %vm408, %v399
      %411 = vst.msk [vmem:[#allocation4 + $0x20] sm:$0xff] %vm408, %v401
      %412 = vst.msk [vmem:[#allocation4 + $0x30] sm:$0xff] %vm408, %v403
      %v413 = vld [vmem:[%s264 + $0x1] sm:$0xff]
      %v414 = vld [vmem:[%s264 + $0x11] sm:$0xff]
      %v415 = vld [vmem:[%s264 + $0x21] sm:$0xff]
      %v416 = vld [vmem:[%s264 + $0x31] sm:$0xff]
      %v417 = vld [vmem:[%s264 + $0x41] sm:$0xff]
      %v418 = vld [vmem:[%s264 + $0x51] sm:$0xff]
      %v419 = vld [vmem:[%s264 + $0x61] sm:$0xff]
      %v420 = vld [vmem:[%s264 + $0x71] sm:$0xff]
      %v421 = vpack.c.bf16 %v414, %v413
      %v422 = vpack.c.bf16 %v416, %v415
      %v423 = vpack.c.bf16 %v418, %v417
      %v424 = vpack.c.bf16 %v420, %v419
      %429 = vrot.lane.b32.xlu0 %v421, 64
      %v430 = vpop.permute.xlu0 %429
      %431 = vrot.lane.b32.xlu0 %v422, 64
      %v432 = vpop.permute.xlu0 %431
      %433 = vrot.lane.b32.xlu0 %v423, 64
      %v434 = vpop.permute.xlu0 %433
      %435 = vrot.lane.b32.xlu0 %v424, 64
      %v436 = vpop.permute.xlu0 %435
      %vm441 = vcmask 654848
      %442 = vst.msk [vmem:[#allocation4] sm:$0xff] %vm441, %v430
      %443 = vst.msk [vmem:[#allocation4 + $0x10] sm:$0xff] %vm441, %v432
      %444 = vst.msk [vmem:[#allocation4 + $0x20] sm:$0xff] %vm441, %v434
      %445 = vst.msk [vmem:[#allocation4 + $0x30] sm:$0xff] %vm441, %v436
      %v446 = vld [vmem:[%s264 + $0x2] sm:$0xff]
      %v447 = vld [vmem:[%s264 + $0x12] sm:$0xff]
      %v448 = vld [vmem:[%s264 + $0x22] sm:$0xff]
      %v449 = vld [vmem:[%s264 + $0x32] sm:$0xff]
      %v450 = vld [vmem:[%s264 + $0x42] sm:$0xff]
      %v451 = vld [vmem:[%s264 + $0x52] sm:$0xff]
      %v452 = vld [vmem:[%s264 + $0x62] sm:$0xff]
      %v453 = vld [vmem:[%s264 + $0x72] sm:$0xff]
      %v454 = vpack.c.bf16 %v447, %v446
      %v455 = vpack.c.bf16 %v449, %v448
      %v456 = vpack.c.bf16 %v451, %v450
      %v457 = vpack.c.bf16 %v453, %v452
      %462 = vrot.lane.b32.xlu0 %v454, 80
      %v463 = vpop.permute.xlu0 %462
      %464 = vrot.lane.b32.xlu0 %v455, 80
      %v465 = vpop.permute.xlu0 %464
      %466 = vrot.lane.b32.xlu0 %v456, 80
      %v467 = vpop.permute.xlu0 %466
      %468 = vrot.lane.b32.xlu0 %v457, 80
      %v469 = vpop.permute.xlu0 %468
      %vm474 = vcmask 786048
      %475 = vst.msk [vmem:[#allocation4] sm:$0xff] %vm474, %v463
      %476 = vst.msk [vmem:[#allocation4 + $0x10] sm:$0xff] %vm474, %v465
      %477 = vst.msk [vmem:[#allocation4 + $0x20] sm:$0xff] %vm474, %v467
      %478 = vst.msk [vmem:[#allocation4 + $0x30] sm:$0xff] %vm474, %v469
      %s479 = scalar_lea.vmem [#allocation2], 32
      %v480 = vld [vmem:[%s479] sm:$0xff]
      %v481 = vld [vmem:[%s479 + $0x10] sm:$0xff]
      %v482 = vld [vmem:[%s479 + $0x20] sm:$0xff]
      %v483 = vld [vmem:[%s479 + $0x30] sm:$0xff]
      %v484 = vld [vmem:[%s479 + $0x40] sm:$0xff]
      %v485 = vld [vmem:[%s479 + $0x50] sm:$0xff]
      %v486 = vld [vmem:[%s479 + $0x60] sm:$0xff]
      %v487 = vld [vmem:[%s479 + $0x70] sm:$0xff]
      %v488 = vpack.c.bf16 %v481, %v480
      %v489 = vpack.c.bf16 %v483, %v482
      %v490 = vpack.c.bf16 %v485, %v484
      %v491 = vpack.c.bf16 %v487, %v486
      %496 = vrot.lane.b32.xlu0 %v488, 96
      %v497 = vpop.permute.xlu0 %496
      %498 = vrot.lane.b32.xlu0 %v489, 96
      %v499 = vpop.permute.xlu0 %498
      %500 = vrot.lane.b32.xlu0 %v490, 96
      %v501 = vpop.permute.xlu0 %500
      %502 = vrot.lane.b32.xlu0 %v491, 96
      %v503 = vpop.permute.xlu0 %502
      %vm508 = vcmask 917248
      %509 = vst.msk [vmem:[#allocation4] sm:$0xff] %vm508, %v497
      %510 = vst.msk [vmem:[#allocation4 + $0x10] sm:$0xff] %vm508, %v499
      %511 = vst.msk [vmem:[#allocation4 + $0x20] sm:$0xff] %vm508, %v501
      %512 = vst.msk [vmem:[#allocation4 + $0x30] sm:$0xff] %vm508, %v503
      %v513 = vld [vmem:[%s479 + $0x1] sm:$0xff]
      %v514 = vld [vmem:[%s479 + $0x11] sm:$0xff]
      %v515 = vld [vmem:[%s479 + $0x21] sm:$0xff]
      %v516 = vld [vmem:[%s479 + $0x31] sm:$0xff]
      %v517 = vld [vmem:[%s479 + $0x41] sm:$0xff]
      %v518 = vld [vmem:[%s479 + $0x51] sm:$0xff]
      %v519 = vld [vmem:[%s479 + $0x61] sm:$0xff]
      %v520 = vld [vmem:[%s479 + $0x71] sm:$0xff]
      %v521 = vpack.c.bf16 %v514, %v513
      %v522 = vpack.c.bf16 %v516, %v515
      %v523 = vpack.c.bf16 %v518, %v517
      %v524 = vpack.c.bf16 %v520, %v519
      %529 = vrot.lane.b32.xlu0 %v521, 112
      %v530 = vpop.permute.xlu0 %529
      %531 = vrot.lane.b32.xlu0 %v522, 112
      %v532 = vpop.permute.xlu0 %531
      %533 = vrot.lane.b32.xlu0 %v523, 112
      %v534 = vpop.permute.xlu0 %533
      %535 = vrot.lane.b32.xlu0 %v524, 112
      %v536 = vpop.permute.xlu0 %535
      %vm541 = vcmask 1048448
      %542 = vst.msk [vmem:[#allocation4] sm:$0xff] %vm541, %v530
      %543 = vst.msk [vmem:[#allocation4 + $0x10] sm:$0xff] %vm541, %v532
      %544 = vst.msk [vmem:[#allocation4 + $0x20] sm:$0xff] %vm541, %v534
      %545 = vst.msk [vmem:[#allocation4 + $0x30] sm:$0xff] %vm541, %v536
      %v546 = vld [vmem:[%s479 + $0x2] sm:$0xff]
      %v547 = vld [vmem:[%s479 + $0x12] sm:$0xff]
      %v548 = vld [vmem:[%s479 + $0x22] sm:$0xff]
      %v549 = vld [vmem:[%s479 + $0x32] sm:$0xff]
      %v550 = vld [vmem:[%s479 + $0x42] sm:$0xff]
      %v551 = vld [vmem:[%s479 + $0x52] sm:$0xff]
      %v552 = vld [vmem:[%s479 + $0x62] sm:$0xff]
      %v553 = vld [vmem:[%s479 + $0x72] sm:$0xff]
      %v554 = vpack.c.bf16 %v547, %v546
      %v555 = vpack.c.bf16 %v549, %v548
      %v556 = vpack.c.bf16 %v551, %v550
      %v557 = vpack.c.bf16 %v553, %v552
      %558 = vst.msk [vmem:[#allocation4 + $0x8] sm:$0xff] %vm192, %v554
      %559 = vst.msk [vmem:[#allocation4 + $0x18] sm:$0xff] %vm192, %v555
      %560 = vst.msk [vmem:[#allocation4 + $0x28] sm:$0xff] %vm192, %v556
      %561 = vst.msk [vmem:[#allocation4 + $0x38] sm:$0xff] %vm192, %v557
      %v562 = vld [vmem:[#allocation3] sm:$0xff]
      %v563 = vld [vmem:[#allocation3 + $0x10] sm:$0xff]
      %v564 = vld [vmem:[#allocation3 + $0x20] sm:$0xff]
      %v565 = vld [vmem:[#allocation3 + $0x30] sm:$0xff]
      %v566 = vld [vmem:[#allocation3 + $0x40] sm:$0xff]
      %v567 = vld [vmem:[#allocation3 + $0x50] sm:$0xff]
      %v568 = vld [vmem:[#allocation3 + $0x60] sm:$0xff]
      %v569 = vld [vmem:[#allocation3 + $0x70] sm:$0xff]
      %v570 = vpack.c.bf16 %v563, %v562
      %v571 = vpack.c.bf16 %v565, %v564
      %v572 = vpack.c.bf16 %v567, %v566
      %v573 = vpack.c.bf16 %v569, %v568
      %578 = vrot.lane.b32.xlu0 %v570, 16
      %v579 = vpop.permute.xlu0 %578
      %580 = vrot.lane.b32.xlu0 %v571, 16
      %v581 = vpop.permute.xlu0 %580
      %582 = vrot.lane.b32.xlu0 %v572, 16
      %v583 = vpop.permute.xlu0 %582
      %584 = vrot.lane.b32.xlu0 %v573, 16
      %v585 = vpop.permute.xlu0 %584
      %vm590 = vcmask 162944
      %591 = vst.msk [vmem:[#allocation4 + $0x8] sm:$0xff] %vm590, %v579
      %592 = vst.msk [vmem:[#allocation4 + $0x18] sm:$0xff] %vm590, %v581
      %593 = vst.msk [vmem:[#allocation4 + $0x28] sm:$0xff] %vm590, %v583
      %594 = vst.msk [vmem:[#allocation4 + $0x38] sm:$0xff] %vm590, %v585
      %v595 = vld [vmem:[#allocation3 + $0x1] sm:$0xff]
      %v596 = vld [vmem:[#allocation3 + $0x11] sm:$0xff]
      %v597 = vld [vmem:[#allocation3 + $0x21] sm:$0xff]
      %v598 = vld [vmem:[#allocation3 + $0x31] sm:$0xff]
      %v599 = vld [vmem:[#allocation3 + $0x41] sm:$0xff]
      %v600 = vld [vmem:[#allocation3 + $0x51] sm:$0xff]
      %v601 = vld [vmem:[#allocation3 + $0x61] sm:$0xff]
      %v602 = vld [vmem:[#allocation3 + $0x71] sm:$0xff]
      %v603 = vpack.c.bf16 %v596, %v595
      %v604 = vpack.c.bf16 %v598, %v597
      %v605 = vpack.c.bf16 %v600, %v599
      %v606 = vpack.c.bf16 %v602, %v601
      %611 = vrot.lane.b32.xlu0 %v603, 20
      %v612 = vpop.permute.xlu0 %611
      %613 = vrot.lane.b32.xlu0 %v604, 20
      %v614 = vpop.permute.xlu0 %613
      %615 = vrot.lane.b32.xlu0 %v605, 20
      %v616 = vpop.permute.xlu0 %615
      %617 = vrot.lane.b32.xlu0 %v606, 20
      %v618 = vpop.permute.xlu0 %617
      %vm623 = vcmask 195744
      %624 = vst.msk [vmem:[#allocation4 + $0x8] sm:$0xff] %vm623, %v612
      %625 = vst.msk [vmem:[#allocation4 + $0x18] sm:$0xff] %vm623, %v614
      %626 = vst.msk [vmem:[#allocation4 + $0x28] sm:$0xff] %vm623, %v616
      %627 = vst.msk [vmem:[#allocation4 + $0x38] sm:$0xff] %vm623, %v618
      %v628 = vld [vmem:[#allocation3 + $0x2] sm:$0xff]
      %v629 = vld [vmem:[#allocation3 + $0x12] sm:$0xff]
      %v630 = vld [vmem:[#allocation3 + $0x22] sm:$0xff]
      %v631 = vld [vmem:[#allocation3 + $0x32] sm:$0xff]
      %v632 = vld [vmem:[#allocation3 + $0x42] sm:$0xff]
      %v633 = vld [vmem:[#allocation3 + $0x52] sm:$0xff]
      %v634 = vld [vmem:[#allocation3 + $0x62] sm:$0xff]
      %v635 = vld [vmem:[#allocation3 + $0x72] sm:$0xff]
      %v636 = vpack.c.bf16 %v629, %v628
      %v637 = vpack.c.bf16 %v631, %v630
      %v638 = vpack.c.bf16 %v633, %v632
      %v639 = vpack.c.bf16 %v635, %v634
      %644 = vrot.lane.b32.xlu0 %v636, 24
      %v645 = vpop.permute.xlu0 %644
      %646 = vrot.lane.b32.xlu0 %v637, 24
      %v647 = vpop.permute.xlu0 %646
      %648 = vrot.lane.b32.xlu0 %v638, 24
      %v649 = vpop.permute.xlu0 %648
      %650 = vrot.lane.b32.xlu0 %v639, 24
      %v651 = vpop.permute.xlu0 %650
      %vm656 = vcmask 228544
      %657 = vst.msk [vmem:[#allocation4 + $0x8] sm:$0xff] %vm656, %v645
      %658 = vst.msk [vmem:[#allocation4 + $0x18] sm:$0xff] %vm656, %v647
      %659 = vst.msk [vmem:[#allocation4 + $0x28] sm:$0xff] %vm656, %v649
      %660 = vst.msk [vmem:[#allocation4 + $0x38] sm:$0xff] %vm656, %v651
      %v661 = vld [vmem:[%s289] sm:$0xff]
      %v662 = vld [vmem:[%s289 + $0x10] sm:$0xff]
      %v663 = vld [vmem:[%s289 + $0x20] sm:$0xff]
      %v664 = vld [vmem:[%s289 + $0x30] sm:$0xff]
      %v665 = vld [vmem:[%s289 + $0x40] sm:$0xff]
      %v666 = vld [vmem:[%s289 + $0x50] sm:$0xff]
      %v667 = vld [vmem:[%s289 + $0x60] sm:$0xff]
      %v668 = vld [vmem:[%s289 + $0x70] sm:$0xff]
      %v669 = vpack.c.bf16 %v662, %v661
      %v670 = vpack.c.bf16 %v664, %v663
      %v671 = vpack.c.bf16 %v666, %v665
      %v672 = vpack.c.bf16 %v668, %v667
      %677 = vrot.lane.b32.xlu0 %v669, 28
      %v678 = vpop.permute.xlu0 %677
      %679 = vrot.lane.b32.xlu0 %v670, 28
      %v680 = vpop.permute.xlu0 %679
      %681 = vrot.lane.b32.xlu0 %v671, 28
      %v682 = vpop.permute.xlu0 %681
      %683 = vrot.lane.b32.xlu0 %v672, 28
      %v684 = vpop.permute.xlu0 %683
      %vm689 = vcmask 261344
      %690 = vst.msk [vmem:[#allocation4 + $0x8] sm:$0xff] %vm689, %v678
      %691 = vst.msk [vmem:[#allocation4 + $0x18] sm:$0xff] %vm689, %v680
      %692 = vst.msk [vmem:[#allocation4 + $0x28] sm:$0xff] %vm689, %v682
      %693 = vst.msk [vmem:[#allocation4 + $0x38] sm:$0xff] %vm689, %v684
      %v694 = vld [vmem:[%s289 + $0x1] sm:$0xff]
      %v695 = vld [vmem:[%s289 + $0x11] sm:$0xff]
      %v696 = vld [vmem:[%s289 + $0x21] sm:$0xff]
      %v697 = vld [vmem:[%s289 + $0x31] sm:$0xff]
      %v698 = vld [vmem:[%s289 + $0x41] sm:$0xff]
      %v699 = vld [vmem:[%s289 + $0x51] sm:$0xff]
      %v700 = vld [vmem:[%s289 + $0x61] sm:$0xff]
      %v701 = vld [vmem:[%s289 + $0x71] sm:$0xff]
      %v702 = vpack.c.bf16 %v695, %v694
      %v703 = vpack.c.bf16 %v697, %v696
      %v704 = vpack.c.bf16 %v699, %v698
      %v705 = vpack.c.bf16 %v701, %v700
      %710 = vrot.lane.b32.xlu0 %v702, 32
      %v711 = vpop.permute.xlu0 %710
      %712 = vrot.lane.b32.xlu0 %v703, 32
      %v713 = vpop.permute.xlu0 %712
      %714 = vrot.lane.b32.xlu0 %v704, 32
      %v715 = vpop.permute.xlu0 %714
      %716 = vrot.lane.b32.xlu0 %v705, 32
      %v717 = vpop.permute.xlu0 %716
      %vm722 = vcmask 294144
      %723 = vst.msk [vmem:[#allocation4 + $0x8] sm:$0xff] %vm722, %v711
      %724 = vst.msk [vmem:[#allocation4 + $0x18] sm:$0xff] %vm722, %v713
      %725 = vst.msk [vmem:[#allocation4 + $0x28] sm:$0xff] %vm722, %v715
      %726 = vst.msk [vmem:[#allocation4 + $0x38] sm:$0xff] %vm722, %v717
      %v727 = vld [vmem:[%s289 + $0x2] sm:$0xff]
      %v728 = vld [vmem:[%s289 + $0x12] sm:$0xff]
      %v729 = vld [vmem:[%s289 + $0x22] sm:$0xff]
      %v730 = vld [vmem:[%s289 + $0x32] sm:$0xff]
      %v731 = vld [vmem:[%s289 + $0x42] sm:$0xff]
      %v732 = vld [vmem:[%s289 + $0x52] sm:$0xff]
      %v733 = vld [vmem:[%s289 + $0x62] sm:$0xff]
      %v734 = vld [vmem:[%s289 + $0x72] sm:$0xff]
      %v735 = vpack.c.bf16 %v728, %v727
      %v736 = vpack.c.bf16 %v730, %v729
      %v737 = vpack.c.bf16 %v732, %v731
      %v738 = vpack.c.bf16 %v734, %v733
      %743 = vrot.lane.b32.xlu0 %v735, 36
      %v744 = vpop.permute.xlu0 %743
      %745 = vrot.lane.b32.xlu0 %v736, 36
      %v746 = vpop.permute.xlu0 %745
      %747 = vrot.lane.b32.xlu0 %v737, 36
      %v748 = vpop.permute.xlu0 %747
      %749 = vrot.lane.b32.xlu0 %v738, 36
      %v750 = vpop.permute.xlu0 %749
      %vm755 = vcmask 326944
      %756 = vst.msk [vmem:[#allocation4 + $0x8] sm:$0xff] %vm755, %v744
      %757 = vst.msk [vmem:[#allocation4 + $0x18] sm:$0xff] %vm755, %v746
      %758 = vst.msk [vmem:[#allocation4 + $0x28] sm:$0xff] %vm755, %v748
      %759 = vst.msk [vmem:[#allocation4 + $0x38] sm:$0xff] %vm755, %v750
      %s760 = scalar_lea.vmem [#allocation3], 32
      %v761 = vld [vmem:[%s760] sm:$0xff]
      %v762 = vld [vmem:[%s760 + $0x10] sm:$0xff]
      %v763 = vld [vmem:[%s760 + $0x20] sm:$0xff]
      %v764 = vld [vmem:[%s760 + $0x30] sm:$0xff]
      %v765 = vld [vmem:[%s760 + $0x40] sm:$0xff]
      %v766 = vld [vmem:[%s760 + $0x50] sm:$0xff]
      %v767 = vld [vmem:[%s760 + $0x60] sm:$0xff]
      %v768 = vld [vmem:[%s760 + $0x70] sm:$0xff]
      %v769 = vpack.c.bf16 %v762, %v761
      %v770 = vpack.c.bf16 %v764, %v763
      %v771 = vpack.c.bf16 %v766, %v765
      %v772 = vpack.c.bf16 %v768, %v767
      %777 = vrot.lane.b32.xlu0 %v769, 40
      %v778 = vpop.permute.xlu0 %777
      %779 = vrot.lane.b32.xlu0 %v770, 40
      %v780 = vpop.permute.xlu0 %779
      %781 = vrot.lane.b32.xlu0 %v771, 40
      %v782 = vpop.permute.xlu0 %781
      %783 = vrot.lane.b32.xlu0 %v772, 40
      %v784 = vpop.permute.xlu0 %783
      %vm789 = vcmask 359744
      %790 = vst.msk [vmem:[#allocation4 + $0x8] sm:$0xff] %vm789, %v778
      %791 = vst.msk [vmem:[#allocation4 + $0x18] sm:$0xff] %vm789, %v780
      %792 = vst.msk [vmem:[#allocation4 + $0x28] sm:$0xff] %vm789, %v782
      %793 = vst.msk [vmem:[#allocation4 + $0x38] sm:$0xff] %vm789, %v784
      %v794 = vld [vmem:[%s760 + $0x1] sm:$0xff]
      %v795 = vld [vmem:[%s760 + $0x11] sm:$0xff]
      %v796 = vld [vmem:[%s760 + $0x21] sm:$0xff]
      %v797 = vld [vmem:[%s760 + $0x31] sm:$0xff]
      %v798 = vld [vmem:[%s760 + $0x41] sm:$0xff]
      %v799 = vld [vmem:[%s760 + $0x51] sm:$0xff]
      %v800 = vld [vmem:[%s760 + $0x61] sm:$0xff]
      %v801 = vld [vmem:[%s760 + $0x71] sm:$0xff]
      %v802 = vpack.c.bf16 %v795, %v794
      %v803 = vpack.c.bf16 %v797, %v796
      %v804 = vpack.c.bf16 %v799, %v798
      %v805 = vpack.c.bf16 %v801, %v800
      %810 = vrot.lane.b32.xlu0 %v802, 44
      %v811 = vpop.permute.xlu0 %810
      %812 = vrot.lane.b32.xlu0 %v803, 44
      %v813 = vpop.permute.xlu0 %812
      %814 = vrot.lane.b32.xlu0 %v804, 44
      %v815 = vpop.permute.xlu0 %814
      %816 = vrot.lane.b32.xlu0 %v805, 44
      %v817 = vpop.permute.xlu0 %816
      %vm822 = vcmask 392544
      %823 = vst.msk [vmem:[#allocation4 + $0x8] sm:$0xff] %vm822, %v811
      %824 = vst.msk [vmem:[#allocation4 + $0x18] sm:$0xff] %vm822, %v813
      %825 = vst.msk [vmem:[#allocation4 + $0x28] sm:$0xff] %vm822, %v815
      %826 = vst.msk [vmem:[#allocation4 + $0x38] sm:$0xff] %vm822, %v817
      %v827 = vld [vmem:[%s760 + $0x2] sm:$0xff]
      %v828 = vld [vmem:[%s760 + $0x12] sm:$0xff]
      %v829 = vld [vmem:[%s760 + $0x22] sm:$0xff]
      %v830 = vld [vmem:[%s760 + $0x32] sm:$0xff]
      %v831 = vld [vmem:[%s760 + $0x42] sm:$0xff]
      %v832 = vld [vmem:[%s760 + $0x52] sm:$0xff]
      %v833 = vld [vmem:[%s760 + $0x62] sm:$0xff]
      %v834 = vld [vmem:[%s760 + $0x72] sm:$0xff]
      %v835 = vpack.c.bf16 %v828, %v827
      %v836 = vpack.c.bf16 %v830, %v829
      %v837 = vpack.c.bf16 %v832, %v831
      %v838 = vpack.c.bf16 %v834, %v833
      %843 = vrot.lane.b32.xlu0 %v835, 48
      %v844 = vpop.permute.xlu0 %843
      %845 = vrot.lane.b32.xlu0 %v836, 48
      %v846 = vpop.permute.xlu0 %845
      %847 = vrot.lane.b32.xlu0 %v837, 48
      %v848 = vpop.permute.xlu0 %847
      %849 = vrot.lane.b32.xlu0 %v838, 48
      %v850 = vpop.permute.xlu0 %849
      %vm855 = vcmask 425344
      %856 = vst.msk [vmem:[#allocation4 + $0x8] sm:$0xff] %vm855, %v844
      %857 = vst.msk [vmem:[#allocation4 + $0x18] sm:$0xff] %vm855, %v846
      %858 = vst.msk [vmem:[#allocation4 + $0x28] sm:$0xff] %vm855, %v848
      %859 = vst.msk [vmem:[#allocation4 + $0x38] sm:$0xff] %vm855, %v850
      %v860 = vld [vmem:[#allocation4] sm:$0xff]
      %v861 = vld [vmem:[#allocation4 + $0x8] sm:$0xff]
      %v862 = vld [vmem:[#allocation4 + $0x10] sm:$0xff]
      %v863 = vld [vmem:[#allocation4 + $0x18] sm:$0xff]
      %v864 = vld [vmem:[#allocation4 + $0x20] sm:$0xff]
      %v865 = vld [vmem:[#allocation4 + $0x28] sm:$0xff]
      %v866 = vld [vmem:[#allocation4 + $0x30] sm:$0xff]
      %v867 = vld [vmem:[#allocation4 + $0x38] sm:$0xff]
      %v868 = vld [vmem:[%s2] sm:$0xf]
      %v869 = vld [vmem:[%s2 + $0x4] sm:$0xf]
      %v870 = vld [vmem:[%s2 + $0x8] sm:$0xf]
      %v871 = vld [vmem:[%s2 + $0xc] sm:$0xf]
      %v872 = vld [vmem:[%s2 + $0x10] sm:$0xf]
      %v873 = vld [vmem:[%s2 + $0x14] sm:$0xf]
      %v874 = vld [vmem:[%s2 + $0x18] sm:$0xf]
      %v875 = vld [vmem:[%s2 + $0x1c] sm:$0xf]
      %v876 = vld [vmem:[%s2 + $0x20] sm:$0xf]
      %v877 = vld [vmem:[%s2 + $0x24] sm:$0xf]
      %v878 = vld [vmem:[%s2 + $0x28] sm:$0xf]
      %v879 = vld [vmem:[%s2 + $0x2c] sm:$0xf]
      %v880 = vld [vmem:[%s2 + $0x30] sm:$0xf]
      %v881 = vld [vmem:[%s2 + $0x34] sm:$0xf]
      %v882 = vld [vmem:[%s2 + $0x38] sm:$0xf]
      %v883 = vld [vmem:[%s2 + $0x3c] sm:$0xf]
      %v884 = vld [vmem:[%s2 + $0x40] sm:$0xf]
      %v885 = vld [vmem:[%s2 + $0x44] sm:$0xf]
      %v886 = vld [vmem:[%s2 + $0x48] sm:$0xf]
      %v887 = vld [vmem:[%s2 + $0x4c] sm:$0xf]
      %v888 = vld [vmem:[%s2 + $0x50] sm:$0xf]
      %v889 = vld [vmem:[%s2 + $0x54] sm:$0xf]
      %v890 = vld [vmem:[%s2 + $0x58] sm:$0x3]
      %v914 = vunpack.c.l.b16 %v868
      %v915 = vunpack.c.l.b16 %v869
      %v916 = vunpack.c.l.b16 %v870
      %v917 = vunpack.c.l.b16 %v871
      %v918 = vunpack.c.l.b16 %v872
      %v919 = vunpack.c.l.b16 %v873
      %v920 = vunpack.c.l.b16 %v874
      %v921 = vunpack.c.l.b16 %v875
      %v922 = vunpack.c.l.b16 %v876
      %v923 = vunpack.c.l.b16 %v877
      %v924 = vunpack.c.l.b16 %v878
      %v925 = vunpack.c.l.b16 %v879
      %v926 = vunpack.c.l.b16 %v880
      %v927 = vunpack.c.l.b16 %v881
      %v928 = vunpack.c.l.b16 %v882
      %v929 = vunpack.c.l.b16 %v883
      %v930 = vunpack.c.l.b16 %v884
      %v931 = vunpack.c.l.b16 %v885
      %v932 = vunpack.c.l.b16 %v886
      %v933 = vunpack.c.l.b16 %v887
      %v934 = vunpack.c.l.b16 %v888
      %v935 = vunpack.c.l.b16 %v889
      %v936 = vunpack.c.l.b16 %v890
      %v937 = vpack.c.b16 %v915, %v914
      %v938 = vpack.c.b16 %v917, %v916
      %v939 = vpack.c.b16 %v919, %v918
      %v940 = vpack.c.b16 %v921, %v920
      %v941 = vpack.c.b16 %v923, %v922
      %v942 = vpack.c.b16 %v925, %v924
      %v943 = vpack.c.b16 %v927, %v926
      %v944 = vpack.c.b16 %v929, %v928
      %v945 = vpack.c.b16 %v931, %v930
      %v946 = vpack.c.b16 %v933, %v932
      %v947 = vpack.c.b16 %v935, %v934
      %v948 = vpack.c.b16 %v936, %v936
      %vm960 = vcmask 424960
      %v962 = vsel %vm960, %v861, 0
      %v965 = vsel %vm960, %v863, 0
      %v968 = vsel %vm960, %v865, 0
      %v971 = vsel %vm960, %v867, 0
      %vm973 = vcmask 1041408
      %v975 = vsel %vm973, %v948, 0
      %977 = vmatprep.subr.bf16.mxu0 0
      %978 = vmatpush1.bf16.msra.mxu0 %v937
      %979 = vmatprep.subr.bf16.mxu0 0
      %980 = vmatpush1.bf16.msra.mxu0 %v938
      %981 = vmatprep.subr.bf16.mxu0 0
      %982 = vmatpush1.bf16.msra.mxu0 %v939
      %983 = vmatprep.subr.bf16.mxu0 0
      %984 = vmatpush1.bf16.msra.mxu0 %v940
      %985 = vmatprep.subr.bf16.mxu0 0
      %986 = vmatpush1.bf16.msra.mxu0 %v941
      %987 = vmatprep.subr.bf16.mxu0 0
      %988 = vmatpush1.bf16.msra.mxu0 %v942
      %989 = vmatprep.subr.bf16.mxu0 0
      %990 = vmatpush1.bf16.msra.mxu0 %v943
      %991 = vmatprep.subr.bf16.mxu0 0
      %992 = vmatpush1.bf16.msra.mxu0 %v944
      %993 = vmatprep.subr.bf16.mxu0 0
      %994 = vmatpush1.bf16.msra.mxu0 %v945
      %995 = vmatprep.subr.bf16.mxu0 0
      %996 = vmatpush1.bf16.msra.mxu0 %v946
      %997 = vmatprep.subr.bf16.mxu0 0
      %998 = vmatpush1.bf16.msra.mxu0 %v947
      %999 = vmatprep.subr.bf16.mxu0 0
      %1000 = vmatpush1.bf16.msra.mxu0 %v975
      %1001 = vmatprep.subr.bf16.mxu0 0
      %1002 = vmatpush1.bf16.msra.mxu0 0
      %1003 = vmatprep.subr.bf16.mxu0 0
      %1004 = vmatpush1.bf16.msra.mxu0 0
      %1005 = vmatprep.subr.bf16.mxu0 0
      %1006 = vmatpush1.bf16.msra.mxu0 0
      %1007 = vmatprep.subr.bf16.mxu0 0
      %1008 = vmatpush1.bf16.msra.mxu0 0
      %1009 = vmatprep.mubr.bf16.mxu0 %v962
      %1010 = vmatmul.mubr.bf16.gmra.mrb[0].mxu0 %v860
      %v1011 = vpop.f32.mrb[0].mxu0
      %v1012 = vadd.f32 0.0, %v1011
      %v1013 = vpop.f32.mrb[0].mxu0
      %v1014 = vpop.f32.mrb[0].mxu0
      %v1015 = vadd.f32 0.0, %v1014
      %v1016 = vpop.f32.mrb[0].mxu0
      %1017 = vmatprep.mubr.bf16.mxu0 %v965
      %1018 = vmatmul.mubr.bf16.gmra.mrb[0].mxu0 %v862
      %v1019 = vpop.f32.mrb[0].mxu0
      %v1020 = vadd.f32 0.0, %v1019
      %v1021 = vpop.f32.mrb[0].mxu0
      %v1022 = vpop.f32.mrb[0].mxu0
      %v1023 = vadd.f32 0.0, %v1022
      %v1024 = vpop.f32.mrb[0].mxu0
      %1025 = vmatprep.mubr.bf16.mxu0 %v968
      %1026 = vmatmul.mubr.bf16.gmra.mrb[0].mxu0 %v864
      %v1027 = vpop.f32.mrb[0].mxu0
      %v1028 = vadd.f32 0.0, %v1027
      %v1029 = vpop.f32.mrb[0].mxu0
      %v1030 = vpop.f32.mrb[0].mxu0
      %v1031 = vadd.f32 0.0, %v1030
      %v1032 = vpop.f32.mrb[0].mxu0
      %1033 = vmatprep.mubr.bf16.mxu0 %v971
      %1034 = vmatmul.mubr.bf16.gmra.mrb[0].mxu0 %v866
      %v1035 = vpop.f32.mrb[0].mxu0
      %v1036 = vadd.f32 0.0, %v1035
      %v1037 = vpop.f32.mrb[0].mxu0
      %v1038 = vpop.f32.mrb[0].mxu0
      %v1039 = vadd.f32 0.0, %v1038
      %v1040 = vpop.f32.mrb[0].mxu0
      %1041 = vdwg.mxu0
      %1042 = vst [vmem:[%s190] sm:$0xff] %v1012
      %1043 = vst [vmem:[%s190 + $0x8] sm:$0xff] %v1015
      %1044 = vst [vmem:[%s190 + $0x10] sm:$0xff] %v1020
      %1045 = vst [vmem:[%s190 + $0x18] sm:$0xff] %v1023
      %1046 = vst [vmem:[%s190 + $0x20] sm:$0xff] %v1028
      %1047 = vst [vmem:[%s190 + $0x28] sm:$0xff] %v1031
      %1048 = vst [vmem:[%s190 + $0x30] sm:$0xff] %v1036
      %1049 = vst [vmem:[%s190 + $0x38] sm:$0xff] %v1039
      %p1050 = scmp.lt.s32.totalorder %s14, 1
      %s1051 = scalar_select %p1050, %s14, 1
      %s1052 = smul.addr %s1051, 8
      %s1053 = smul.addr %s1052, 8
      %s1054 = scalar_lea.vmem %s3, %s1053
      // Predicated region
      $region33: #{octave_conv_forward.1} parent=31 // pred_check
        %p1055 = pneg %p105
      $region34: #{octave_conv_forward.1} parent=31 // pred_check_branch
        %1057 = sbr.rel (%p1055) target = $region36
      $region35: #{octave_conv_forward.1} parent=31 // pred_region
        _
      $region36: #{octave_conv_forward.1} parent=31 // pred_fallthru
        _
    $region32: #{octave_conv_forward.1} parent=5 // pred_fallthru
      _
    %p1058 = scmp.le.s32.totalorder 2, %s9
    // Predicated region
    $region37: #{octave_conv_forward.1} parent=5 // pred_check
      %p1059 = pneg %p1058
    $region38: #{octave_conv_forward.1} parent=5 // pred_check_branch
      %1061 = sbr.rel (%p1059) target = $region40
    $region39: #{octave_conv_forward.1} parent=5 // pred_region
      %s1062 = ssub.s32 %s9, 2
      // Predicated region
      $region41: #{octave_conv_forward.1} parent=39 // pred_check
        %p1063 = pneg %p111
      $region42: #{octave_conv_forward.1} parent=39 // pred_check_branch
        %1065 = sbr.rel (%p1063) target = $region44
      $region43: #{octave_conv_forward.1} parent=39 // pred_region
        %p1066 = scmp.lt.s32.totalorder %s15, 1
        %s1067 = scalar_select %p1066, %s15, 1
        %s1068 = smul.addr %s1067, 8
        %s1069 = smul.addr %s1068, 8
        %s1070 = scalar_lea.vmem %s3, %s1069
      $region44: #{octave_conv_forward.1} parent=39 // pred_fallthru
        _
    $region40: #{octave_conv_forward.1} parent=5 // pred_fallthru
      _
  $region6: #{octave_conv_forward.1} parent=0 // loop_footer
    %s13 = sadd.s32 1, %s9
  $region7: #{octave_conv_forward.1} parent=0 // loop_footer_branch
    %8 = sbr.rel target = $region3
  $region8: #{octave_conv_forward.1} parent=0 // loop_exit
    _

</llo_original>
